<compile_context>
chip_gen: v7x
topology: tpu7x:2x2x1
jax: 0.10.0
libtpu: 0.0.40
codegen_flags: <defaults>
</compile_context>

<pallas_src>
import math

import jax
import jax.numpy as jnp
from jax.experimental import pallas as pl
from jax.experimental.pallas import tpu as pltpu

# --- model dims (small, consistent with the module's forward) ---------------
B, S, H = 2, 8, 32          # batch, seq_length, hidden_size
HEADS = 4                   # heads_num
DH = H // HEADS             # attention_head_size
FF = 64                     # feedforward_size
LN_EPS = 1e-6

W_COLS = 4 * H + 2 * FF     # 256 = 2 x 128 lanes (unmasked vector loads)
VEC_LANES = 128             # padded lane width of the small-vector slab


def transformer_block_kernel(x_ref, mask_ref, w_ref, vec_ref, out_ref):
    x = x_ref[...].astype(jnp.float32)                  # (B*S, H)
    m = mask_ref[...].astype(jnp.float32)               # (B*S, B*S) block-diag additive

    W = w_ref[...]                                       # (H, 256) packed weights
    V = vec_ref[...]                                     # (8, 128) packed vectors

    wqkv = W[:, 0:3 * H]              # (H, 3H) — wq columns pre-scaled by 1/sqrt(DH)
    wo   = W[:, 3 * H:4 * H]          # (H, H)
    w1   = W[:, 4 * H:4 * H + FF]     # (H, FF)
    w2t  = W[:, 4 * H + FF:W_COLS]    # (H, FF) = w2^T

    bqkv = V[0:1, 0:3 * H]
    b1   = V[1:2, 0:FF]
    bo   = V[2:3, 0:H]
    g1   = V[3:4, 0:H]
    be1  = V[4:5, 0:H]
    b2   = V[5:6, 0:H]
    g2   = V[6:7, 0:H]
    be2  = V[7:8, 0:H]

    # --- fused QKV projection: one MXU pass, lane width 3H ---
    qkv = jnp.dot(x, wqkv, preferred_element_type=jnp.float32) + bqkv
    q, k, v = qkv[:, :H], qkv[:, H:2 * H], qkv[:, 2 * H:]

    # --- multi-headed self attention (scale folded into wq/bq) ---
    ctx_parts = []
    for h in range(HEADS):                               # static unroll over heads
        cs = slice(h * DH, (h + 1) * DH)
        qh, kh, vh = q[:, cs], k[:, cs], v[:, cs]
        s = jax.lax.dot_general(qh, kh, (((1,), (1,)), ((), ())),
                                preferred_element_type=jnp.float32)
        s = s + m
        s = s - jnp.max(s, axis=-1, keepdims=True)
        p = jnp.exp(s)
        # exact divide: denominator >= 1 after max-subtraction, never 0.
        p = p / jnp.sum(p, axis=-1, keepdims=True)
        ctx_parts.append(jnp.dot(p, vh, preferred_element_type=jnp.float32))
    ctx = jnp.concatenate(ctx_parts, axis=-1)            # (B*S, H)
    # output projection hoisted out of the head loop: one matmul instead of 4
    att = jnp.dot(ctx, wo, preferred_element_type=jnp.float32) + bo

    def layer_norm(t, g, be):
        mu = jnp.mean(t, axis=-1, keepdims=True)
        var = jnp.mean((t - mu) ** 2, axis=-1, keepdims=True)
        return g * (t - mu) * jax.lax.rsqrt(var + LN_EPS) + be

    # --- post-layernorm: LN(attn + hidden) ---
    inter = layer_norm(att + x, g1, be1)

    # --- position-wise feed forward with exact (erf) GELU ---
    h1 = jnp.dot(inter, w1, preferred_element_type=jnp.float32) + b1
    h1 = 0.5 * h1 * (1.0 + jax.lax.erf(h1 * jnp.float32(1.0 / math.sqrt(2.0))))
    ff = jax.lax.dot_general(h1, w2t, (((1,), (1,)), ((), ())),
                             preferred_element_type=jnp.float32) + b2

    out = layer_norm(ff + inter, g2, be2)
    out_ref[...] = out.astype(out_ref.dtype)


def pack_params(params):
    """Pack 16 parameter arrays into one (H,256) weight slab + one (8,128) vector slab."""
    (wq, bq, wk, bk, wv, bv, wo, bo,
     g1, be1, w1, b1, w2, b2, g2, be2) = params
    scale = jnp.float32(1.0 / math.sqrt(DH))
    # fold the attention scale into the Q columns (weight folding, materialized once)
    wqkv = jnp.concatenate([wq * scale, wk, wv], axis=1)          # (H, 3H)
    bqkv = jnp.concatenate([bq * scale, bk, bv], axis=1)          # (1, 3H)
    W = jnp.concatenate([wqkv, wo, w1, w2.T], axis=1)             # (H, 256)

    def row(vv):
        return jnp.pad(vv, ((0, 0), (0, VEC_LANES - vv.shape[1])))

    V = jnp.concatenate([row(bqkv), row(b1), row(bo), row(g1),
                         row(be1), row(b2), row(g2), row(be2)], axis=0)  # (8, 128)
    return W.astype(jnp.float32), V.astype(jnp.float32)


def build_block_diag_mask(mask):
    """(B,1,S,S) additive mask -> (B*S, B*S) block-diagonal additive mask."""
    m = mask[:, 0].astype(jnp.float32)                   # (B, S, S)
    eye = jnp.eye(B, dtype=jnp.float32)                  # (B, B)
    big = (m[:, None, :, :] * eye[:, :, None, None]
           + (1.0 - eye)[:, :, None, None] * jnp.float32(-1e9))   # (B, B, S, S)
    return big.transpose(0, 2, 1, 3).reshape(B * S, B * S)


def transformer_block(hidden, mask, params):
    """hidden: (B,S,H) f32, mask: (B,1,S,S) additive f32, params: 16 arrays."""
    W, V = pack_params(params)                 # layout plumbing, not compute
    x2 = hidden.reshape(B * S, H)
    big_mask = build_block_diag_mask(mask)

    def fs(shape):
        nd = len(shape)
        return pl.BlockSpec(shape, lambda i, _nd=nd: (0,) * _nd)

    out2 = pl.pallas_call(
        transformer_block_kernel,
        out_shape=jax.ShapeDtypeStruct((B * S, H), hidden.dtype),
        grid=(1,),
        in_specs=[fs((B * S, H)),              # flattened hidden
                  fs((B * S, B * S)),          # block-diagonal additive mask
                  fs((H, W_COLS)),             # packed weight slab
                  fs((8, VEC_LANES))],         # packed bias/gamma/beta slab
        out_specs=fs((B * S, H)),
        compiler_params=pltpu.CompilerParams(
            dimension_semantics=("arbitrary",)),
    )(x2, big_mask, W, V)

    return out2.reshape(B, S, H)


def reference_block(hidden, mask, params):
    """Pure-JAX reference of the same forward pass (for verification)."""
    (wq, bq, wk, bk, wv, bv, wo, bo,
     g1, be1, w1, b1, w2, b2, g2, be2) = params
    hp = jax.lax.Precision.HIGHEST
    x = hidden
    q = jnp.dot(x, wq, precision=hp) + bq
    k = jnp.dot(x, wk, precision=hp) + bk
    v = jnp.dot(x, wv, precision=hp) + bv

    def split(t):  # (B,S,H) -> (B,heads,S,dh)
        return t.reshape(B, S, HEADS, DH).transpose(0, 2, 1, 3)

    qh, kh, vh = split(q), split(k), split(v)
    scores = jnp.einsum("bhsd,bhtd->bhst", qh, kh, precision=hp) / math.sqrt(DH)
    scores = scores + mask  # (B,1,S,S) broadcast over heads
    probs = jax.nn.softmax(scores, axis=-1)
    ctx = jnp.einsum("bhst,bhtd->bhsd", probs, vh, precision=hp)
    ctx = ctx.transpose(0, 2, 1, 3).reshape(B, S, H)
    att = jnp.dot(ctx, wo, precision=hp) + bo

    def ln(t, g, b):
        mu = jnp.mean(t, axis=-1, keepdims=True)
        var = jnp.mean((t - mu) ** 2, axis=-1, keepdims=True)
        return g * (t - mu) / jnp.sqrt(var + LN_EPS) + b

    inter = ln(att + x, g1, be1)
    h1 = jnp.dot(inter, w1, precision=hp) + b1
    h1 = 0.5 * h1 * (1.0 + jax.lax.erf(h1 / math.sqrt(2.0)))
    ff = jnp.dot(h1, w2, precision=hp) + b2
    return ln(ff + inter, g2, be2)


if __name__ == "__main__":
    key = jax.random.PRNGKey(0)
    keys = jax.random.split(key, 16)

    def w(k, shape, scale=0.02):
        return (scale * jax.random.normal(k, shape)).astype(jnp.float32)

    # parameters (all 2D so they map cleanly onto TPU tiles)
    wq = w(keys[0], (H, H)); bq = w(keys[1], (1, H))
    wk = w(keys[2], (H, H)); bk = w(keys[3], (1, H))
    wv = w(keys[4], (H, H)); bv = w(keys[5], (1, H))
    wo = w(keys[6], (H, H)); bo = w(keys[7], (1, H))
    g1 = jnp.ones((1, H), jnp.float32); be1 = jnp.zeros((1, H), jnp.float32)
    w1 = w(keys[8], (H, FF)); b1 = w(keys[9], (1, FF))
    w2 = w(keys[10], (FF, H)); b2 = w(keys[11], (1, H))
    g2 = jnp.ones((1, H), jnp.float32); be2 = jnp.zeros((1, H), jnp.float32)
    params = (wq, bq, wk, bk, wv, bv, wo, bo,
              g1, be1, w1, b1, w2, b2, g2, be2)

    hidden = jax.random.normal(keys[12], (B, S, H), jnp.float32)

    # attention mask: sequence 0 fully valid, sequence 1 has length 5
    valid = jnp.array([[1] * S, [1] * 5 + [0] * (S - 5)], jnp.float32)  # (B,S)
    mask01 = valid[:, None, None, :] * jnp.ones((1, 1, S, 1), jnp.float32)
    add_mask = (1.0 - mask01) * -10000.0                                # (B,1,S,S)

    out = transformer_block(hidden, add_mask, params)
    out = jax.block_until_ready(out)

    ref = reference_block(hidden, add_mask, params)
    assert out.shape == (B, S, H)
    # tolerance tightened from 1e-3 -> 1e-4 now that the softmax normalizer
    # uses an exact divide instead of the EUP approximate reciprocal.
    assert jnp.allclose(out, ref, rtol=1e-4, atol=1e-4), (
        f"max abs err {jnp.max(jnp.abs(out - ref))}")

    # TODO(synk): dropout layers are eval-mode identities here (no RNG dropout).
    print("KERNEL_OK")
</pallas_src>

<mosaic_0001>
module attributes {stable_mosaic.version = 11 : i64} {
  func.func @transformer_block_kernel(%arg0: i32, %arg1: memref<16x32xf32, #tpu.memory_space<vmem>>, %arg2: memref<16x16xf32, #tpu.memory_space<vmem>>, %arg3: memref<32x256xf32, #tpu.memory_space<vmem>>, %arg4: memref<8x128xf32, #tpu.memory_space<vmem>>, %arg5: memref<16x32xf32, #tpu.memory_space<vmem>>) attributes {dimension_semantics = [#tpu.dimension_semantics<arbitrary>], iteration_bounds = array<i64: 1>, scalar_prefetch = 0 : i64, scratch_operands = 0 : i64, tpu.core_type = #tpu.core_type<tc>, window_params = [{pipeline_mode = #tpu.pipeline_mode<synchronous>, transform_indices = @transform_0, window_bounds = array<i64: 16, 32>}, {pipeline_mode = #tpu.pipeline_mode<synchronous>, transform_indices = @transform_1, window_bounds = array<i64: 16, 16>}, {pipeline_mode = #tpu.pipeline_mode<synchronous>, transform_indices = @transform_2, window_bounds = array<i64: 32, 256>}, {pipeline_mode = #tpu.pipeline_mode<synchronous>, transform_indices = @transform_3, window_bounds = array<i64: 8, 128>}, {pipeline_mode = #tpu.pipeline_mode<synchronous>, transform_indices = @transform_4, window_bounds = array<i64: 16, 32>}]} {
    %c0 = arith.constant 0 : index
    %c0_0 = arith.constant 0 : index
    %0 = vector.load %arg1[%c0, %c0_0] : memref<16x32xf32, #tpu.memory_space<vmem>>, vector<16x32xf32>
    %c0_1 = arith.constant 0 : index
    %c0_2 = arith.constant 0 : index
    %1 = vector.load %arg2[%c0_1, %c0_2] : memref<16x16xf32, #tpu.memory_space<vmem>>, vector<16x16xf32>
    %c0_3 = arith.constant 0 : index
    %c0_4 = arith.constant 0 : index
    %2 = vector.load %arg3[%c0_3, %c0_4] : memref<32x256xf32, #tpu.memory_space<vmem>>, vector<32x256xf32>
    %c0_5 = arith.constant 0 : index
    %c0_6 = arith.constant 0 : index
    %3 = vector.load %arg4[%c0_5, %c0_6] : memref<8x128xf32, #tpu.memory_space<vmem>>, vector<8x128xf32>
    %4 = vector.extract_strided_slice %2 {offsets = [0, 0], sizes = [32, 96], strides = [1, 1]} : vector<32x256xf32> to vector<32x96xf32>
    %5 = vector.extract_strided_slice %2 {offsets = [0, 96], sizes = [32, 32], strides = [1, 1]} : vector<32x256xf32> to vector<32x32xf32>
    %6 = vector.extract_strided_slice %2 {offsets = [0, 128], sizes = [32, 64], strides = [1, 1]} : vector<32x256xf32> to vector<32x64xf32>
    %7 = vector.extract_strided_slice %2 {offsets = [0, 192], sizes = [32, 64], strides = [1, 1]} : vector<32x256xf32> to vector<32x64xf32>
    %8 = vector.extract_strided_slice %3 {offsets = [0, 0], sizes = [1, 96], strides = [1, 1]} : vector<8x128xf32> to vector<1x96xf32>
    %9 = vector.extract_strided_slice %3 {offsets = [1, 0], sizes = [1, 64], strides = [1, 1]} : vector<8x128xf32> to vector<1x64xf32>
    %10 = vector.extract_strided_slice %3 {offsets = [2, 0], sizes = [1, 32], strides = [1, 1]} : vector<8x128xf32> to vector<1x32xf32>
    %11 = vector.extract_strided_slice %3 {offsets = [3, 0], sizes = [1, 32], strides = [1, 1]} : vector<8x128xf32> to vector<1x32xf32>
    %12 = vector.extract_strided_slice %3 {offsets = [4, 0], sizes = [1, 32], strides = [1, 1]} : vector<8x128xf32> to vector<1x32xf32>
    %13 = vector.extract_strided_slice %3 {offsets = [5, 0], sizes = [1, 32], strides = [1, 1]} : vector<8x128xf32> to vector<1x32xf32>
    %14 = vector.extract_strided_slice %3 {offsets = [6, 0], sizes = [1, 32], strides = [1, 1]} : vector<8x128xf32> to vector<1x32xf32>
    %15 = vector.extract_strided_slice %3 {offsets = [7, 0], sizes = [1, 32], strides = [1, 1]} : vector<8x128xf32> to vector<1x32xf32>
    %cst = arith.constant dense<0.000000e+00> : vector<16x96xf32>
    %16 = tpu.matmul %0, %4, %cst {dimension_numbers = #tpu.dot_dimension_numbers<[1], [0], [0], [1], [0, 0, 1, 1], [], []>} : vector<16x32xf32>, vector<32x96xf32>, vector<16x96xf32> -> vector<16x96xf32>
    %17 = vector.broadcast %8 : vector<1x96xf32> to vector<16x96xf32>
    %18 = arith.addf %16, %17 : vector<16x96xf32>
    %19 = vector.extract_strided_slice %18 {offsets = [0, 0], sizes = [16, 32], strides = [1, 1]} : vector<16x96xf32> to vector<16x32xf32>
    %20 = vector.extract_strided_slice %18 {offsets = [0, 32], sizes = [16, 32], strides = [1, 1]} : vector<16x96xf32> to vector<16x32xf32>
    %21 = vector.extract_strided_slice %18 {offsets = [0, 64], sizes = [16, 32], strides = [1, 1]} : vector<16x96xf32> to vector<16x32xf32>
    %22 = vector.extract_strided_slice %19 {offsets = [0, 0], sizes = [16, 8], strides = [1, 1]} : vector<16x32xf32> to vector<16x8xf32>
    %23 = vector.extract_strided_slice %20 {offsets = [0, 0], sizes = [16, 8], strides = [1, 1]} : vector<16x32xf32> to vector<16x8xf32>
    %24 = vector.extract_strided_slice %21 {offsets = [0, 0], sizes = [16, 8], strides = [1, 1]} : vector<16x32xf32> to vector<16x8xf32>
    %cst_7 = arith.constant dense<0.000000e+00> : vector<16x16xf32>
    %25 = tpu.matmul %22, %23, %cst_7 {dimension_numbers = #tpu.dot_dimension_numbers<[1], [1], [0], [0], [0, 0, 1, 0], [], []>} : vector<16x8xf32>, vector<16x8xf32>, vector<16x16xf32> -> vector<16x16xf32>
    %26 = arith.addf %25, %1 : vector<16x16xf32>
    %cst_8 = arith.constant dense<0xFF800000> : vector<16xf32>
    %27 = vector.multi_reduction <maximumf>, %26, %cst_8 [1] : vector<16x16xf32> to vector<16xf32>
    %28 = vector.shape_cast %27 : vector<16xf32> to vector<16x1xf32>
    %29 = vector.broadcast %28 : vector<16x1xf32> to vector<16x16xf32>
    %30 = arith.subf %26, %29 : vector<16x16xf32>
    %31 = math.exp %30 : vector<16x16xf32>
    %cst_9 = arith.constant dense<0.000000e+00> : vector<16xf32>
    %32 = vector.multi_reduction <add>, %31, %cst_9 [1] : vector<16x16xf32> to vector<16xf32>
    %33 = vector.shape_cast %32 : vector<16xf32> to vector<16x1xf32>
    %34 = vector.broadcast %33 : vector<16x1xf32> to vector<16x16xf32>
    %35 = arith.divf %31, %34 : vector<16x16xf32>
    %cst_10 = arith.constant dense<0.000000e+00> : vector<16x8xf32>
    %36 = tpu.matmul %35, %24, %cst_10 {dimension_numbers = #tpu.dot_dimension_numbers<[1], [0], [0], [1], [0, 0, 1, 1], [], []>} : vector<16x16xf32>, vector<16x8xf32>, vector<16x8xf32> -> vector<16x8xf32>
    %37 = vector.extract_strided_slice %19 {offsets = [0, 8], sizes = [16, 8], strides = [1, 1]} : vector<16x32xf32> to vector<16x8xf32>
    %38 = vector.extract_strided_slice %20 {offsets = [0, 8], sizes = [16, 8], strides = [1, 1]} : vector<16x32xf32> to vector<16x8xf32>
    %39 = vector.extract_strided_slice %21 {offsets = [0, 8], sizes = [16, 8], strides = [1, 1]} : vector<16x32xf32> to vector<16x8xf32>
    %cst_11 = arith.constant dense<0.000000e+00> : vector<16x16xf32>
    %40 = tpu.matmul %37, %38, %cst_11 {dimension_numbers = #tpu.dot_dimension_numbers<[1], [1], [0], [0], [0, 0, 1, 0], [], []>} : vector<16x8xf32>, vector<16x8xf32>, vector<16x16xf32> -> vector<16x16xf32>
    %41 = arith.addf %40, %1 : vector<16x16xf32>
    %cst_12 = arith.constant dense<0xFF800000> : vector<16xf32>
    %42 = vector.multi_reduction <maximumf>, %41, %cst_12 [1] : vector<16x16xf32> to vector<16xf32>
    %43 = vector.shape_cast %42 : vector<16xf32> to vector<16x1xf32>
    %44 = vector.broadcast %43 : vector<16x1xf32> to vector<16x16xf32>
    %45 = arith.subf %41, %44 : vector<16x16xf32>
    %46 = math.exp %45 : vector<16x16xf32>
    %cst_13 = arith.constant dense<0.000000e+00> : vector<16xf32>
    %47 = vector.multi_reduction <add>, %46, %cst_13 [1] : vector<16x16xf32> to vector<16xf32>
    %48 = vector.shape_cast %47 : vector<16xf32> to vector<16x1xf32>
    %49 = vector.broadcast %48 : vector<16x1xf32> to vector<16x16xf32>
    %50 = arith.divf %46, %49 : vector<16x16xf32>
    %cst_14 = arith.constant dense<0.000000e+00> : vector<16x8xf32>
    %51 = tpu.matmul %50, %39, %cst_14 {dimension_numbers = #tpu.dot_dimension_numbers<[1], [0], [0], [1], [0, 0, 1, 1], [], []>} : vector<16x16xf32>, vector<16x8xf32>, vector<16x8xf32> -> vector<16x8xf32>
    %52 = vector.extract_strided_slice %19 {offsets = [0, 16], sizes = [16, 8], strides = [1, 1]} : vector<16x32xf32> to vector<16x8xf32>
    %53 = vector.extract_strided_slice %20 {offsets = [0, 16], sizes = [16, 8], strides = [1, 1]} : vector<16x32xf32> to vector<16x8xf32>
    %54 = vector.extract_strided_slice %21 {offsets = [0, 16], sizes = [16, 8], strides = [1, 1]} : vector<16x32xf32> to vector<16x8xf32>
    %cst_15 = arith.constant dense<0.000000e+00> : vector<16x16xf32>
    %55 = tpu.matmul %52, %53, %cst_15 {dimension_numbers = #tpu.dot_dimension_numbers<[1], [1], [0], [0], [0, 0, 1, 0], [], []>} : vector<16x8xf32>, vector<16x8xf32>, vector<16x16xf32> -> vector<16x16xf32>
    %56 = arith.addf %55, %1 : vector<16x16xf32>
    %cst_16 = arith.constant dense<0xFF800000> : vector<16xf32>
    %57 = vector.multi_reduction <maximumf>, %56, %cst_16 [1] : vector<16x16xf32> to vector<16xf32>
    %58 = vector.shape_cast %57 : vector<16xf32> to vector<16x1xf32>
    %59 = vector.broadcast %58 : vector<16x1xf32> to vector<16x16xf32>
    %60 = arith.subf %56, %59 : vector<16x16xf32>
    %61 = math.exp %60 : vector<16x16xf32>
    %cst_17 = arith.constant dense<0.000000e+00> : vector<16xf32>
    %62 = vector.multi_reduction <add>, %61, %cst_17 [1] : vector<16x16xf32> to vector<16xf32>
    %63 = vector.shape_cast %62 : vector<16xf32> to vector<16x1xf32>
    %64 = vector.broadcast %63 : vector<16x1xf32> to vector<16x16xf32>
    %65 = arith.divf %61, %64 : vector<16x16xf32>
    %cst_18 = arith.constant dense<0.000000e+00> : vector<16x8xf32>
    %66 = tpu.matmul %65, %54, %cst_18 {dimension_numbers = #tpu.dot_dimension_numbers<[1], [0], [0], [1], [0, 0, 1, 1], [], []>} : vector<16x16xf32>, vector<16x8xf32>, vector<16x8xf32> -> vector<16x8xf32>
    %67 = vector.extract_strided_slice %19 {offsets = [0, 24], sizes = [16, 8], strides = [1, 1]} : vector<16x32xf32> to vector<16x8xf32>
    %68 = vector.extract_strided_slice %20 {offsets = [0, 24], sizes = [16, 8], strides = [1, 1]} : vector<16x32xf32> to vector<16x8xf32>
    %69 = vector.extract_strided_slice %21 {offsets = [0, 24], sizes = [16, 8], strides = [1, 1]} : vector<16x32xf32> to vector<16x8xf32>
    %cst_19 = arith.constant dense<0.000000e+00> : vector<16x16xf32>
    %70 = tpu.matmul %67, %68, %cst_19 {dimension_numbers = #tpu.dot_dimension_numbers<[1], [1], [0], [0], [0, 0, 1, 0], [], []>} : vector<16x8xf32>, vector<16x8xf32>, vector<16x16xf32> -> vector<16x16xf32>
    %71 = arith.addf %70, %1 : vector<16x16xf32>
    %cst_20 = arith.constant dense<0xFF800000> : vector<16xf32>
    %72 = vector.multi_reduction <maximumf>, %71, %cst_20 [1] : vector<16x16xf32> to vector<16xf32>
    %73 = vector.shape_cast %72 : vector<16xf32> to vector<16x1xf32>
    %74 = vector.broadcast %73 : vector<16x1xf32> to vector<16x16xf32>
    %75 = arith.subf %71, %74 : vector<16x16xf32>
    %76 = math.exp %75 : vector<16x16xf32>
    %cst_21 = arith.constant dense<0.000000e+00> : vector<16xf32>
    %77 = vector.multi_reduction <add>, %76, %cst_21 [1] : vector<16x16xf32> to vector<16xf32>
    %78 = vector.shape_cast %77 : vector<16xf32> to vector<16x1xf32>
    %79 = vector.broadcast %78 : vector<16x1xf32> to vector<16x16xf32>
    %80 = arith.divf %76, %79 : vector<16x16xf32>
    %cst_22 = arith.constant dense<0.000000e+00> : vector<16x8xf32>
    %81 = tpu.matmul %80, %69, %cst_22 {dimension_numbers = #tpu.dot_dimension_numbers<[1], [0], [0], [1], [0, 0, 1, 1], [], []>} : vector<16x16xf32>, vector<16x8xf32>, vector<16x8xf32> -> vector<16x8xf32>
    %82 = tpu.concatenate %36, %51, %66, %81 in 1 : vector<16x8xf32>, vector<16x8xf32>, vector<16x8xf32>, vector<16x8xf32> -> vector<16x32xf32>
    %cst_23 = arith.constant dense<0.000000e+00> : vector<16x32xf32>
    %83 = tpu.matmul %82, %5, %cst_23 {dimension_numbers = #tpu.dot_dimension_numbers<[1], [0], [0], [1], [0, 0, 1, 1], [], []>} : vector<16x32xf32>, vector<32x32xf32>, vector<16x32xf32> -> vector<16x32xf32>
    %84 = vector.broadcast %10 : vector<1x32xf32> to vector<16x32xf32>
    %85 = arith.addf %83, %84 : vector<16x32xf32>
    %86 = arith.addf %85, %0 : vector<16x32xf32>
    %cst_24 = arith.constant dense<0.000000e+00> : vector<16xf32>
    %87 = vector.multi_reduction <add>, %86, %cst_24 [1] : vector<16x32xf32> to vector<16xf32>
    %88 = vector.shape_cast %87 : vector<16xf32> to vector<16x1xf32>
    %cst_25 = arith.constant 3.200000e+01 : f32
    %89 = vector.broadcast %cst_25 : f32 to vector<16x1xf32>
    %90 = arith.divf %88, %89 : vector<16x1xf32>
    %91 = vector.broadcast %90 : vector<16x1xf32> to vector<16x32xf32>
    %92 = arith.subf %86, %91 : vector<16x32xf32>
    %93 = arith.mulf %92, %92 : vector<16x32xf32>
    %cst_26 = arith.constant dense<0.000000e+00> : vector<16xf32>
    %94 = vector.multi_reduction <add>, %93, %cst_26 [1] : vector<16x32xf32> to vector<16xf32>
    %95 = vector.shape_cast %94 : vector<16xf32> to vector<16x1xf32>
    %cst_27 = arith.constant 3.200000e+01 : f32
    %96 = vector.broadcast %cst_27 : f32 to vector<16x1xf32>
    %97 = arith.divf %95, %96 : vector<16x1xf32>
    %98 = vector.broadcast %90 : vector<16x1xf32> to vector<16x32xf32>
    %99 = arith.subf %86, %98 : vector<16x32xf32>
    %100 = vector.broadcast %11 : vector<1x32xf32> to vector<16x32xf32>
    %101 = arith.mulf %100, %99 : vector<16x32xf32>
    %cst_28 = arith.constant 9.99999997E-7 : f32
    %102 = vector.broadcast %cst_28 : f32 to vector<16x1xf32>
    %103 = arith.addf %97, %102 : vector<16x1xf32>
    %104 = math.rsqrt %103 : vector<16x1xf32>
    %105 = vector.broadcast %104 : vector<16x1xf32> to vector<16x32xf32>
    %106 = arith.mulf %101, %105 : vector<16x32xf32>
    %107 = vector.broadcast %12 : vector<1x32xf32> to vector<16x32xf32>
    %108 = arith.addf %106, %107 : vector<16x32xf32>
    %cst_29 = arith.constant dense<0.000000e+00> : vector<16x64xf32>
    %109 = tpu.matmul %108, %6, %cst_29 {dimension_numbers = #tpu.dot_dimension_numbers<[1], [0], [0], [1], [0, 0, 1, 1], [], []>} : vector<16x32xf32>, vector<32x64xf32>, vector<16x64xf32> -> vector<16x64xf32>
    %110 = vector.broadcast %9 : vector<1x64xf32> to vector<16x64xf32>
    %111 = arith.addf %109, %110 : vector<16x64xf32>
    %cst_30 = arith.constant 5.000000e-01 : f32
    %112 = vector.broadcast %cst_30 : f32 to vector<16x64xf32>
    %113 = arith.mulf %112, %111 : vector<16x64xf32>
    %cst_31 = arith.constant 0.707106769 : f32
    %114 = vector.broadcast %cst_31 : f32 to vector<16x64xf32>
    %115 = arith.mulf %111, %114 : vector<16x64xf32>
    %116 = math.erf %115 : vector<16x64xf32>
    %cst_32 = arith.constant 1.000000e+00 : f32
    %117 = vector.broadcast %cst_32 : f32 to vector<16x64xf32>
    %118 = arith.addf %117, %116 : vector<16x64xf32>
    %119 = arith.mulf %113, %118 : vector<16x64xf32>
    %cst_33 = arith.constant dense<0.000000e+00> : vector<16x32xf32>
    %120 = tpu.matmul %119, %7, %cst_33 {dimension_numbers = #tpu.dot_dimension_numbers<[1], [1], [0], [0], [0, 0, 1, 0], [], []>} : vector<16x64xf32>, vector<32x64xf32>, vector<16x32xf32> -> vector<16x32xf32>
    %121 = vector.broadcast %13 : vector<1x32xf32> to vector<16x32xf32>
    %122 = arith.addf %120, %121 : vector<16x32xf32>
    %123 = arith.addf %122, %108 : vector<16x32xf32>
    %cst_34 = arith.constant dense<0.000000e+00> : vector<16xf32>
    %124 = vector.multi_reduction <add>, %123, %cst_34 [1] : vector<16x32xf32> to vector<16xf32>
    %125 = vector.shape_cast %124 : vector<16xf32> to vector<16x1xf32>
    %cst_35 = arith.constant 3.200000e+01 : f32
    %126 = vector.broadcast %cst_35 : f32 to vector<16x1xf32>
    %127 = arith.divf %125, %126 : vector<16x1xf32>
    %128 = vector.broadcast %127 : vector<16x1xf32> to vector<16x32xf32>
    %129 = arith.subf %123, %128 : vector<16x32xf32>
    %130 = arith.mulf %129, %129 : vector<16x32xf32>
    %cst_36 = arith.constant dense<0.000000e+00> : vector<16xf32>
    %131 = vector.multi_reduction <add>, %130, %cst_36 [1] : vector<16x32xf32> to vector<16xf32>
    %132 = vector.shape_cast %131 : vector<16xf32> to vector<16x1xf32>
    %cst_37 = arith.constant 3.200000e+01 : f32
    %133 = vector.broadcast %cst_37 : f32 to vector<16x1xf32>
    %134 = arith.divf %132, %133 : vector<16x1xf32>
    %135 = vector.broadcast %127 : vector<16x1xf32> to vector<16x32xf32>
    %136 = arith.subf %123, %135 : vector<16x32xf32>
    %137 = vector.broadcast %14 : vector<1x32xf32> to vector<16x32xf32>
    %138 = arith.mulf %137, %136 : vector<16x32xf32>
    %cst_38 = arith.constant 9.99999997E-7 : f32
    %139 = vector.broadcast %cst_38 : f32 to vector<16x1xf32>
    %140 = arith.addf %134, %139 : vector<16x1xf32>
    %141 = math.rsqrt %140 : vector<16x1xf32>
    %142 = vector.broadcast %141 : vector<16x1xf32> to vector<16x32xf32>
    %143 = arith.mulf %138, %142 : vector<16x32xf32>
    %144 = vector.broadcast %15 : vector<1x32xf32> to vector<16x32xf32>
    %145 = arith.addf %143, %144 : vector<16x32xf32>
    %c0_39 = arith.constant 0 : index
    %c0_40 = arith.constant 0 : index
    %146 = vector.load %arg5[%c0_39, %c0_40] : memref<16x32xf32, #tpu.memory_space<vmem>>, vector<16x32xf32>
    tpu.vector_store %arg5[%c0_39, %c0_40], %145 {strides = array<i32>} : memref<16x32xf32, #tpu.memory_space<vmem>>, vector<16x32xf32>,
    return
  }
  func.func @transform_0(%arg0: i32) -> (i32, i32) {
    %c0_i32 = arith.constant 0 : i32
    %c0_i32_0 = arith.constant 0 : i32
    %c0_i32_1 = arith.constant 0 : i32
    return %c0_i32, %c0_i32_0 : i32, i32
  }
  func.func @transform_1(%arg0: i32) -> (i32, i32) {
    %c0_i32 = arith.constant 0 : i32
    %c0_i32_0 = arith.constant 0 : i32
    %c0_i32_1 = arith.constant 0 : i32
    return %c0_i32, %c0_i32_0 : i32, i32
  }
  func.func @transform_2(%arg0: i32) -> (i32, i32) {
    %c0_i32 = arith.constant 0 : i32
    %c0_i32_0 = arith.constant 0 : i32
    %c0_i32_1 = arith.constant 0 : i32
    return %c0_i32, %c0_i32_0 : i32, i32
  }
  func.func @transform_3(%arg0: i32) -> (i32, i32) {
    %c0_i32 = arith.constant 0 : i32
    %c0_i32_0 = arith.constant 0 : i32
    %c0_i32_1 = arith.constant 0 : i32
    return %c0_i32, %c0_i32_0 : i32, i32
  }
  func.func @transform_4(%arg0: i32) -> (i32, i32) {
    %c0_i32 = arith.constant 0 : i32
    %c0_i32_0 = arith.constant 0 : i32
    %c0_i32_1 = arith.constant 0 : i32
    return %c0_i32, %c0_i32_0 : i32, i32
  }
}

</mosaic_0001>

<llo_original>
// kernel: tpu_custom_call.1
$region0: #{tpu_custom_call.1}
  #allocation0 [shape = 'u32[]', space=smem, size = 0x4, offset = 0x4, fixed_abs, tag = 'smem constant byte address 0x4 - core index']
  #allocation1 [shape = 'u32[144,128]{1,0:T(1,128)}', space=vmem, size = 0x12000, scoped, tag = 'internal scratch']
  %s0 = inlined_call_operand.hbm [shape: f32[16,32], index: 0, kind: input, shape index: {}]
  %s1 = inlined_call_operand.hbm [shape: f32[16,16], index: 1, kind: input, shape index: {}]
  %s2 = inlined_call_operand.hbm [shape: f32[32,256], index: 2, kind: input, shape index: {}]
  %s3 = inlined_call_operand.vmem [shape: f32[8,128], index: 3, kind: input, shape index: {}]
  %s4 = inlined_call_operand.hbm [shape: f32[16,32], index: 4, kind: output, shape index: {}]
  %s5 = sld [smem:[#allocation0]]
  $region38: #{tpu_custom_call.1} parent=0
    _
  %s7 = ssub.s32 1, %s5
  %s8 = scalar_select 0, %s7, %s5
  $region1: #{tpu_custom_call.1} parent=0
    #allocation2 [shape = 'u8[8192]{0}', space=vmem, size = 0x2000, scoped, tag = 'input window, operand 0, single buffered']
    #allocation3 [shape = 's32[1]{0}', space=sflag, size = 0x4, scoped, tag = 'scoped memory for tpu_custom_call.1']
    #allocation4 [shape = 's32[1]{0}', space=sflag, size = 0x4, scoped, tag = 'scoped memory for tpu_custom_call.1']
    #allocation5 [shape = 'u8[8192]{0}', space=vmem, size = 0x2000, scoped, tag = 'input window, operand 1, single buffered']
    #allocation6 [shape = 's32[1]{0}', space=sflag, size = 0x4, scoped, tag = 'scoped memory for tpu_custom_call.1']
    #allocation7 [shape = 'u8[32768]{0}', space=vmem, size = 0x8000, scoped, tag = 'input window, operand 2, single buffered']
    #allocation8 [shape = 'u8[8192]{0}', space=vmem, size = 0x2000, scoped, tag = 'output window, operand 0, single buffered']
    %9 = vsyncpa [#allocation3], 0
    %10 = vsyncpa [#allocation6], 0
    %11 = vsyncpa [#allocation4], 0
    // Predicated region
    $region2: #{tpu_custom_call.1} parent=1 // pred_check
      _
    $region3: #{tpu_custom_call.1} parent=1 // pred_check_branch
      %13 = sbr.rel (0) target = $region5
    $region4: #{tpu_custom_call.1} parent=1 // pred_region
      %s15 = ssub.s32 256, 256
      %16 = vsyncadd [#allocation3], %s15
      %s17 = sshll.u32 [#allocation2], 4
      %s18 = int_to_ptr.vmem [resolvable:$true] %s17
      %23 = dma.hbm_to_vmem [thread:$0]  %s0, 256, %s18, [#allocation3], 128, 128, 8
    $region5: #{tpu_custom_call.1} parent=1 // pred_fallthru
      _
    // Predicated region
    $region6: #{tpu_custom_call.1} parent=1 // pred_check
      _
    $region7: #{tpu_custom_call.1} parent=1 // pred_check_branch
      %25 = sbr.rel (0) target = $region9
    $region8: #{tpu_custom_call.1} parent=1 // pred_region
      %s27 = ssub.s32 256, 256
      %28 = vsyncadd [#allocation6], %s27
      %s29 = sshll.u32 [#allocation5], 4
      %s30 = int_to_ptr.vmem [resolvable:$true] %s29
      %35 = dma.hbm_to_vmem [thread:$0]  %s1, 256, %s30, [#allocation6], 128, 128, 8
    $region9: #{tpu_custom_call.1} parent=1 // pred_fallthru
      _
    // Predicated region
    $region10: #{tpu_custom_call.1} parent=1 // pred_check
      _
    $region11: #{tpu_custom_call.1} parent=1 // pred_check_branch
      %37 = sbr.rel (0) target = $region13
    $region12: #{tpu_custom_call.1} parent=1 // pred_region
      %s39 = ssub.s32 1024, 1024
      %40 = vsyncadd [#allocation6], %s39
      %s41 = sshll.u32 [#allocation7], 4
      %s42 = int_to_ptr.vmem [resolvable:$true] %s41
      %47 = dma.hbm_to_vmem [thread:$0]  %s2, 1024, %s42, [#allocation6], 256, 256, 16
    $region13: #{tpu_custom_call.1} parent=1 // pred_fallthru
      _
    // Predicated region
    $region14: #{tpu_custom_call.1} parent=1 // pred_check
      _
    $region15: #{tpu_custom_call.1} parent=1 // pred_check_branch
      %49 = sbr.rel (0) target = $region17
    $region16: #{tpu_custom_call.1} parent=1 // pred_region
      _
    $region17: #{tpu_custom_call.1} parent=1 // pred_fallthru
      _
    // Predicated region
    $region18: #{tpu_custom_call.1} parent=1 // pred_check
      _
    $region19: #{tpu_custom_call.1} parent=1 // pred_check_branch
      %51 = sbr.rel (0) target = $region21
    $region20: #{tpu_custom_call.1} parent=1 // pred_region
      %52 = dma.done [#allocation3], 256
    $region21: #{tpu_custom_call.1} parent=1 // pred_fallthru
      _
    // Predicated region
    $region22: #{tpu_custom_call.1} parent=1 // pred_check
      _
    $region23: #{tpu_custom_call.1} parent=1 // pred_check_branch
      %54 = sbr.rel (0) target = $region25
    $region24: #{tpu_custom_call.1} parent=1 // pred_region
      %55 = dma.done [#allocation6], 256
    $region25: #{tpu_custom_call.1} parent=1 // pred_fallthru
      _
    // Predicated region
    $region26: #{tpu_custom_call.1} parent=1 // pred_check
      _
    $region27: #{tpu_custom_call.1} parent=1 // pred_check_branch
      %57 = sbr.rel (0) target = $region29
    $region28: #{tpu_custom_call.1} parent=1 // pred_region
      %58 = dma.done [#allocation6], 1024
    $region29: #{tpu_custom_call.1} parent=1 // pred_fallthru
      _
    %v59 = vld [vmem:[#allocation2] sm:$0xff]
    %v60 = vld [vmem:[#allocation2 + $0x8] sm:$0xff]
    %v61 = vld [vmem:[#allocation5] sm:$0xff]
    %v62 = vld [vmem:[#allocation5 + $0x8] sm:$0xff]
    %v63 = vld [vmem:[#allocation7] sm:$0xff]
    %v64 = vld [vmem:[#allocation7 + $0x8] sm:$0xff]
    %v65 = vld [vmem:[#allocation7 + $0x10] sm:$0xff]
    %v66 = vld [vmem:[#allocation7 + $0x18] sm:$0xff]
    %v67 = vld [vmem:[#allocation7 + $0x20] sm:$0xff]
    %v68 = vld [vmem:[#allocation7 + $0x28] sm:$0xff]
    %v69 = vld [vmem:[#allocation7 + $0x30] sm:$0xff]
    %v70 = vld [vmem:[#allocation7 + $0x38] sm:$0xff]
    %v71 = vld [vmem:[%s3] sm:$0xff]
    %v72 = vlaneseq
    %v73 = vshrl.u32 %v72, 7
    %v74 = vsub.s32 0, %v73
    %v75 = vrot.slane %v71, %v74
    %vm76 = vcmask 261120
    %v78 = vsel %vm76, %v59, 0
    %v81 = vsel %vm76, %v60, 0
    %83 = vmatprep.subr.mxu0 0.0
    %84 = vmatpush1.msra.mxu0 %v63
    %85 = vmatprep.subr.mxu0 0.0
    %86 = vmatpush1.msra.mxu0 %v65
    %87 = vmatprep.subr.mxu0 0.0
    %88 = vmatpush1.msra.mxu0 %v67
    %89 = vmatprep.subr.mxu0 0.0
    %90 = vmatpush1.msra.mxu0 %v69
    %91 = vmatprep.subr.mxu0 0.0
    %92 = vmatpush1.msra.mxu0 0.0
    %93 = vmatprep.subr.mxu0 0.0
    %94 = vmatpush1.msra.mxu0 0.0
    %95 = vmatprep.subr.mxu0 0.0
    %96 = vmatpush1.msra.mxu0 0.0
    %97 = vmatprep.subr.mxu0 0.0
    %98 = vmatpush1.msra.mxu0 0.0
    %99 = vmatprep.subr.mxu0 0.0
    %100 = vmatpush1.msra.mxu0 0.0
    %101 = vmatprep.subr.mxu0 0.0
    %102 = vmatpush1.msra.mxu0 0.0
    %103 = vmatprep.subr.mxu0 0.0
    %104 = vmatpush1.msra.mxu0 0.0
    %105 = vmatprep.subr.mxu0 0.0
    %106 = vmatpush1.msra.mxu0 0.0
    %107 = vmatprep.subr.mxu0 0.0
    %108 = vmatpush1.msra.mxu0 0.0
    %109 = vmatprep.subr.mxu0 0.0
    %110 = vmatpush1.msra.mxu0 0.0
    %111 = vmatprep.subr.mxu0 0.0
    %112 = vmatpush1.msra.mxu0 0.0
    %113 = vmatprep.subr.mxu0 0.0
    %114 = vmatpush1.msra.mxu0 0.0
    %115 = vmatprep.subr.mxu0 0.0
    %116 = vmatpush1.msra.mxu0 0.0
    %117 = vmatprep.subr.mxu0 0.0
    %118 = vmatpush1.msra.mxu0 0.0
    %119 = vmatprep.subr.mxu0 0.0
    %120 = vmatpush1.msra.mxu0 0.0
    %121 = vmatprep.subr.mxu0 0.0
    %122 = vmatpush1.msra.mxu0 0.0
    %123 = vmatprep.subr.mxu0 0.0
    %124 = vmatpush1.msra.mxu0 0.0
    %125 = vmatprep.subr.mxu0 0.0
    %126 = vmatpush1.msra.mxu0 0.0
    %127 = vmatprep.subr.mxu0 0.0
    %128 = vmatpush1.msra.mxu0 0.0
    %129 = vmatprep.subr.mxu0 0.0
    %130 = vmatpush1.msra.mxu0 0.0
    %131 = vmatprep.subr.mxu0 0.0
    %132 = vmatpush1.msra.mxu0 0.0
    %133 = vmatprep.subr.mxu0 0.0
    %134 = vmatpush1.msra.mxu0 0.0
    %135 = vmatprep.subr.mxu0 0.0
    %136 = vmatpush1.msra.mxu0 0.0
    %137 = vmatprep.subr.mxu0 0.0
    %138 = vmatpush1.msra.mxu0 0.0
    %139 = vmatprep.subr.mxu0 0.0
    %140 = vmatpush1.msra.mxu0 0.0
    %141 = vmatprep.subr.mxu0 0.0
    %142 = vmatpush1.msra.mxu0 0.0
    %143 = vmatprep.subr.mxu0 0.0
    %144 = vmatpush1.msra.mxu0 0.0
    %145 = vmatprep.subr.mxu0 0.0
    %146 = vmatpush1.msra.mxu0 0.0
    %147 = vmatprep.mubr.f32.mxu0 0.0
    %148 = vmatmul.mubr.f32.gmra.mrb[0].mxu0 %v78
    %v149 = vpop.f32.mrb[0].mxu0
    %v150 = vadd.f32 %v75, %v149
    %v151 = vpop.f32.mrb[0].mxu0
    %152 = vmatprep.mubr.f32.mxu0 0.0
    %153 = vmatmul.mubr.f32.gmra.mrb[0].mxu0 %v81
    %v154 = vpop.f32.mrb[0].mxu0
    %v155 = vadd.f32 %v75, %v154
    %v156 = vpop.f32.mrb[0].mxu0
    %157 = vdwg.mxu0
    %160 = vrot.lane.b32.xlu0 %v150, 96
    %v161 = vpop.permute.xlu0 %160
    %162 = vrot.lane.b32.xlu0 %v155, 96
    %v163 = vpop.permute.xlu0 %162
    %vm164 = vcmask 64512
    %v165 = vsel %vm164, %v150, 0
    %v167 = vsel %vm164, %v155, 0
    %v169 = vsel %vm164, %v161, 0
    %v171 = vsel %vm164, %v163, 0
    %173 = vmatprep.subr.mxu0 0.0
    %174 = vmatpush1.xpose.msra.mxu0 %v169
    %175 = vmatprep.subr.mxu0 0.0
    %176 = vmatpush1.xpose.msra.mxu0 %v171
    %177 = vmatprep.subr.mxu0 0.0
    %178 = vmatpush1.xpose.msra.mxu0 0.0
    %179 = vmatprep.subr.mxu0 0.0
    %180 = vmatpush1.xpose.msra.mxu0 0.0
    %181 = vmatprep.subr.mxu0 0.0
    %182 = vmatpush1.xpose.msra.mxu0 0.0
    %183 = vmatprep.subr.mxu0 0.0
    %184 = vmatpush1.xpose.msra.mxu0 0.0
    %185 = vmatprep.subr.mxu0 0.0
    %186 = vmatpush1.xpose.msra.mxu0 0.0
    %187 = vmatprep.subr.mxu0 0.0
    %188 = vmatpush1.xpose.msra.mxu0 0.0
    %189 = vmatprep.subr.mxu0 0.0
    %190 = vmatpush1.xpose.msra.mxu0 0.0
    %191 = vmatprep.subr.mxu0 0.0
    %192 = vmatpush1.xpose.msra.mxu0 0.0
    %193 = vmatprep.subr.mxu0 0.0
    %194 = vmatpush1.xpose.msra.mxu0 0.0
    %195 = vmatprep.subr.mxu0 0.0
    %196 = vmatpush1.xpose.msra.mxu0 0.0
    %197 = vmatprep.subr.mxu0 0.0
    %198 = vmatpush1.xpose.msra.mxu0 0.0
    %199 = vmatprep.subr.mxu0 0.0
    %200 = vmatpush1.xpose.msra.mxu0 0.0
    %201 = vmatprep.subr.mxu0 0.0
    %202 = vmatpush1.xpose.msra.mxu0 0.0
    %203 = vmatprep.subr.mxu0 0.0
    %204 = vmatpush1.xpose.msra.mxu0 0.0
    %205 = vmatprep.subr.mxu0 0.0
    %206 = vmatpush1.xpose.msra.mxu0 0.0
    %207 = vmatprep.subr.mxu0 0.0
    %208 = vmatpush1.xpose.msra.mxu0 0.0
    %209 = vmatprep.subr.mxu0 0.0
    %210 = vmatpush1.xpose.msra.mxu0 0.0
    %211 = vmatprep.subr.mxu0 0.0
    %212 = vmatpush1.xpose.msra.mxu0 0.0
    %213 = vmatprep.subr.mxu0 0.0
    %214 = vmatpush1.xpose.msra.mxu0 0.0
    %215 = vmatprep.subr.mxu0 0.0
    %216 = vmatpush1.xpose.msra.mxu0 0.0
    %217 = vmatprep.subr.mxu0 0.0
    %218 = vmatpush1.xpose.msra.mxu0 0.0
    %219 = vmatprep.subr.mxu0 0.0
    %220 = vmatpush1.xpose.msra.mxu0 0.0
    %221 = vmatprep.subr.mxu0 0.0
    %222 = vmatpush1.xpose.msra.mxu0 0.0
    %223 = vmatprep.subr.mxu0 0.0
    %224 = vmatpush1.xpose.msra.mxu0 0.0
    %225 = vmatprep.subr.mxu0 0.0
    %226 = vmatpush1.xpose.msra.mxu0 0.0
    %227 = vmatprep.subr.mxu0 0.0
    %228 = vmatpush1.xpose.msra.mxu0 0.0
    %229 = vmatprep.subr.mxu0 0.0
    %230 = vmatpush1.xpose.msra.mxu0 0.0
    %231 = vmatprep.subr.mxu0 0.0
    %232 = vmatpush1.xpose.msra.mxu0 0.0
    %233 = vmatprep.subr.mxu0 0.0
    %234 = vmatpush1.xpose.msra.mxu0 0.0
    %235 = vmatprep.subr.mxu0 0.0
    %236 = vmatpush1.xpose.msra.mxu0 0.0
    %237 = vmatprep.mubr.f32.mxu0 0.0
    %238 = vmatmul.mubr.f32.gmra.mrb[0].mxu0 %v165
    %v239 = vpop.f32.mrb[0].mxu0
    %v240 = vadd.f32 %v61, %v239
    %v241 = vpop.f32.mrb[0].mxu0
    %242 = vmatprep.mubr.f32.mxu0 0.0
    %243 = vmatmul.mubr.f32.gmra.mrb[0].mxu0 %v167
    %v244 = vpop.f32.mrb[0].mxu0
    %v245 = vadd.f32 %v62, %v244
    %v246 = vpop.f32.mrb[0].mxu0
    %247 = vdwg.mxu0
    %vm248 = vcmask 130048
    %v249 = vsel %vm248, %v240, -inf
    %250 = vmax.xlane.f32.xlu0 %v249
    %v251 = vpop.xlane.xlu0 %250
    %v252 = vsel %vm248, %v245, -inf
    %253 = vmax.xlane.f32.xlu0 %v252
    %v254 = vpop.xlane.xlu0 %253
    %v255 = vsub.f32 %v240, %v251
    %v256 = vsub.f32 %v245, %v254
    %v257 = vmul.f32 %v255, 1.442695
    %v258 = vpow.pop %v257
    %v259 = vmul.f32 %v256, 1.442695
    %v260 = vpow.pop %v259
    %v261 = vsel %vm248, %v258, 0.0
    %262 = vadd.xlane.f32.xlu0 %v261
    %v263 = vpop.xlane.xlu0 %262
    %v264 = vsel %vm248, %v260, 0.0
    %265 = vadd.xlane.f32.xlu0 %v264
    %v266 = vpop.xlane.xlu0 %265
    %v267 = vrcp.pop %v263
    %v268 = vmul.f32 %v258, %v267
    %v269 = vrcp.pop %v266
    %v270 = vmul.f32 %v260, %v269
    %271 = vrot.lane.b32.xlu0 %v150, 64
    %v272 = vpop.permute.xlu0 %271
    %273 = vrot.lane.b32.xlu0 %v155, 64
    %v274 = vpop.permute.xlu0 %273
    %v278 = vsel %vm248, %v268, 0
    %v281 = vsel %vm248, %v270, 0
    %283 = vmatprep.subr.mxu0 0.0
    %284 = vmatpush1.msra.mxu0 %v272
    %285 = vmatprep.subr.mxu0 0.0
    %286 = vmatpush1.msra.mxu0 %v274
    %287 = vmatprep.subr.mxu0 0.0
    %288 = vmatpush1.msra.mxu0 0.0
    %289 = vmatprep.subr.mxu0 0.0
    %290 = vmatpush1.msra.mxu0 0.0
    %291 = vmatprep.subr.mxu0 0.0
    %292 = vmatpush1.msra.mxu0 0.0
    %293 = vmatprep.subr.mxu0 0.0
    %294 = vmatpush1.msra.mxu0 0.0
    %295 = vmatprep.subr.mxu0 0.0
    %296 = vmatpush1.msra.mxu0 0.0
    %297 = vmatprep.subr.mxu0 0.0
    %298 = vmatpush1.msra.mxu0 0.0
    %299 = vmatprep.subr.mxu0 0.0
    %300 = vmatpush1.msra.mxu0 0.0
    %301 = vmatprep.subr.mxu0 0.0
    %302 = vmatpush1.msra.mxu0 0.0
    %303 = vmatprep.subr.mxu0 0.0
    %304 = vmatpush1.msra.mxu0 0.0
    %305 = vmatprep.subr.mxu0 0.0
    %306 = vmatpush1.msra.mxu0 0.0
    %307 = vmatprep.subr.mxu0 0.0
    %308 = vmatpush1.msra.mxu0 0.0
    %309 = vmatprep.subr.mxu0 0.0
    %310 = vmatpush1.msra.mxu0 0.0
    %311 = vmatprep.subr.mxu0 0.0
    %312 = vmatpush1.msra.mxu0 0.0
    %313 = vmatprep.subr.mxu0 0.0
    %314 = vmatpush1.msra.mxu0 0.0
    %315 = vmatprep.subr.mxu0 0.0
    %316 = vmatpush1.msra.mxu0 0.0
    %317 = vmatprep.subr.mxu0 0.0
    %318 = vmatpush1.msra.mxu0 0.0
    %319 = vmatprep.subr.mxu0 0.0
    %320 = vmatpush1.msra.mxu0 0.0
    %321 = vmatprep.subr.mxu0 0.0
    %322 = vmatpush1.msra.mxu0 0.0
    %323 = vmatprep.subr.mxu0 0.0
    %324 = vmatpush1.msra.mxu0 0.0
    %325 = vmatprep.subr.mxu0 0.0
    %326 = vmatpush1.msra.mxu0 0.0
    %327 = vmatprep.subr.mxu0 0.0
    %328 = vmatpush1.msra.mxu0 0.0
    %329 = vmatprep.subr.mxu0 0.0
    %330 = vmatpush1.msra.mxu0 0.0
    %331 = vmatprep.subr.mxu0 0.0
    %332 = vmatpush1.msra.mxu0 0.0
    %333 = vmatprep.subr.mxu0 0.0
    %334 = vmatpush1.msra.mxu0 0.0
    %335 = vmatprep.subr.mxu0 0.0
    %336 = vmatpush1.msra.mxu0 0.0
    %337 = vmatprep.subr.mxu0 0.0
    %338 = vmatpush1.msra.mxu0 0.0
    %339 = vmatprep.subr.mxu0 0.0
    %340 = vmatpush1.msra.mxu0 0.0
    %341 = vmatprep.subr.mxu0 0.0
    %342 = vmatpush1.msra.mxu0 0.0
    %343 = vmatprep.subr.mxu0 0.0
    %344 = vmatpush1.msra.mxu0 0.0
    %345 = vmatprep.subr.mxu0 0.0
    %346 = vmatpush1.msra.mxu0 0.0
    %347 = vmatprep.mubr.f32.mxu0 0.0
    %348 = vmatmul.mubr.f32.gmra.mrb[0].mxu0 %v278
    %v349 = vpop.f32.mrb[0].mxu0
    %v350 = vadd.f32 0.0, %v349
    %v351 = vpop.f32.mrb[0].mxu0
    %352 = vmatprep.mubr.f32.mxu0 0.0
    %353 = vmatmul.mubr.f32.gmra.mrb[0].mxu0 %v281
    %v354 = vpop.f32.mrb[0].mxu0
    %v355 = vadd.f32 0.0, %v354
    %v356 = vpop.f32.mrb[0].mxu0
    %357 = vdwg.mxu0
    %358 = vrot.lane.b32.xlu0 %v150, 120
    %v359 = vpop.permute.xlu0 %358
    %360 = vrot.lane.b32.xlu0 %v155, 120
    %v361 = vpop.permute.xlu0 %360
    %362 = vrot.lane.b32.xlu0 %v150, 88
    %v363 = vpop.permute.xlu0 %362
    %364 = vrot.lane.b32.xlu0 %v155, 88
    %v365 = vpop.permute.xlu0 %364
    %v366 = vsel %vm164, %v359, 0
    %v368 = vsel %vm164, %v361, 0
    %v370 = vsel %vm164, %v363, 0
    %v372 = vsel %vm164, %v365, 0
    %374 = vmatprep.subr.mxu0 0.0
    %375 = vmatpush1.xpose.msra.mxu0 %v370
    %376 = vmatprep.subr.mxu0 0.0
    %377 = vmatpush1.xpose.msra.mxu0 %v372
    %378 = vmatprep.subr.mxu0 0.0
    %379 = vmatpush1.xpose.msra.mxu0 0.0
    %380 = vmatprep.subr.mxu0 0.0
    %381 = vmatpush1.xpose.msra.mxu0 0.0
    %382 = vmatprep.subr.mxu0 0.0
    %383 = vmatpush1.xpose.msra.mxu0 0.0
    %384 = vmatprep.subr.mxu0 0.0
    %385 = vmatpush1.xpose.msra.mxu0 0.0
    %386 = vmatprep.subr.mxu0 0.0
    %387 = vmatpush1.xpose.msra.mxu0 0.0
    %388 = vmatprep.subr.mxu0 0.0
    %389 = vmatpush1.xpose.msra.mxu0 0.0
    %390 = vmatprep.subr.mxu0 0.0
    %391 = vmatpush1.xpose.msra.mxu0 0.0
    %392 = vmatprep.subr.mxu0 0.0
    %393 = vmatpush1.xpose.msra.mxu0 0.0
    %394 = vmatprep.subr.mxu0 0.0
    %395 = vmatpush1.xpose.msra.mxu0 0.0
    %396 = vmatprep.subr.mxu0 0.0
    %397 = vmatpush1.xpose.msra.mxu0 0.0
    %398 = vmatprep.subr.mxu0 0.0
    %399 = vmatpush1.xpose.msra.mxu0 0.0
    %400 = vmatprep.subr.mxu0 0.0
    %401 = vmatpush1.xpose.msra.mxu0 0.0
    %402 = vmatprep.subr.mxu0 0.0
    %403 = vmatpush1.xpose.msra.mxu0 0.0
    %404 = vmatprep.subr.mxu0 0.0
    %405 = vmatpush1.xpose.msra.mxu0 0.0
    %406 = vmatprep.subr.mxu0 0.0
    %407 = vmatpush1.xpose.msra.mxu0 0.0
    %408 = vmatprep.subr.mxu0 0.0
    %409 = vmatpush1.xpose.msra.mxu0 0.0
    %410 = vmatprep.subr.mxu0 0.0
    %411 = vmatpush1.xpose.msra.mxu0 0.0
    %412 = vmatprep.subr.mxu0 0.0
    %413 = vmatpush1.xpose.msra.mxu0 0.0
    %414 = vmatprep.subr.mxu0 0.0
    %415 = vmatpush1.xpose.msra.mxu0 0.0
    %416 = vmatprep.subr.mxu0 0.0
    %417 = vmatpush1.xpose.msra.mxu0 0.0
    %418 = vmatprep.subr.mxu0 0.0
    %419 = vmatpush1.xpose.msra.mxu0 0.0
    %420 = vmatprep.subr.mxu0 0.0
    %421 = vmatpush1.xpose.msra.mxu0 0.0
    %422 = vmatprep.subr.mxu0 0.0
    %423 = vmatpush1.xpose.msra.mxu0 0.0
    %424 = vmatprep.subr.mxu0 0.0
    %425 = vmatpush1.xpose.msra.mxu0 0.0
    %426 = vmatprep.subr.mxu0 0.0
    %427 = vmatpush1.xpose.msra.mxu0 0.0
    %428 = vmatprep.subr.mxu0 0.0
    %429 = vmatpush1.xpose.msra.mxu0 0.0
    %430 = vmatprep.subr.mxu0 0.0
    %431 = vmatpush1.xpose.msra.mxu0 0.0
    %432 = vmatprep.subr.mxu0 0.0
    %433 = vmatpush1.xpose.msra.mxu0 0.0
    %434 = vmatprep.subr.mxu0 0.0
    %435 = vmatpush1.xpose.msra.mxu0 0.0
    %436 = vmatprep.subr.mxu0 0.0
    %437 = vmatpush1.xpose.msra.mxu0 0.0
    %438 = vmatprep.mubr.f32.mxu0 0.0
    %439 = vmatmul.mubr.f32.gmra.mrb[0].mxu0 %v366
    %v440 = vpop.f32.mrb[0].mxu0
    %v441 = vadd.f32 %v61, %v440
    %v442 = vpop.f32.mrb[0].mxu0
    %443 = vmatprep.mubr.f32.mxu0 0.0
    %444 = vmatmul.mubr.f32.gmra.mrb[0].mxu0 %v368
    %v445 = vpop.f32.mrb[0].mxu0
    %v446 = vadd.f32 %v62, %v445
    %v447 = vpop.f32.mrb[0].mxu0
    %448 = vdwg.mxu0
    %v449 = vsel %vm248, %v441, -inf
    %450 = vmax.xlane.f32.xlu0 %v449
    %v451 = vpop.xlane.xlu0 %450
    %v452 = vsel %vm248, %v446, -inf
    %453 = vmax.xlane.f32.xlu0 %v452
    %v454 = vpop.xlane.xlu0 %453
    %v455 = vsub.f32 %v441, %v451
    %v456 = vsub.f32 %v446, %v454
    %v457 = vmul.f32 %v455, 1.442695
    %v458 = vpow.pop %v457
    %v459 = vmul.f32 %v456, 1.442695
    %v460 = vpow.pop %v459
    %v461 = vsel %vm248, %v458, 0.0
    %462 = vadd.xlane.f32.xlu0 %v461
    %v463 = vpop.xlane.xlu0 %462
    %v464 = vsel %vm248, %v460, 0.0
    %465 = vadd.xlane.f32.xlu0 %v464
    %v466 = vpop.xlane.xlu0 %465
    %v467 = vrcp.pop %v463
    %v468 = vmul.f32 %v458, %v467
    %v469 = vrcp.pop %v466
    %v470 = vmul.f32 %v460, %v469
    %471 = vrot.lane.b32.xlu0 %v150, 56
    %v472 = vpop.permute.xlu0 %471
    %473 = vrot.lane.b32.xlu0 %v155, 56
    %v474 = vpop.permute.xlu0 %473
    %v478 = vsel %vm248, %v468, 0
    %v481 = vsel %vm248, %v470, 0
    %483 = vmatprep.subr.mxu0 0.0
    %484 = vmatpush1.msra.mxu0 %v472
    %485 = vmatprep.subr.mxu0 0.0
    %486 = vmatpush1.msra.mxu0 %v474
    %487 = vmatprep.subr.mxu0 0.0
    %488 = vmatpush1.msra.mxu0 0.0
    %489 = vmatprep.subr.mxu0 0.0
    %490 = vmatpush1.msra.mxu0 0.0
    %491 = vmatprep.subr.mxu0 0.0
    %492 = vmatpush1.msra.mxu0 0.0
    %493 = vmatprep.subr.mxu0 0.0
    %494 = vmatpush1.msra.mxu0 0.0
    %495 = vmatprep.subr.mxu0 0.0
    %496 = vmatpush1.msra.mxu0 0.0
    %497 = vmatprep.subr.mxu0 0.0
    %498 = vmatpush1.msra.mxu0 0.0
    %499 = vmatprep.subr.mxu0 0.0
    %500 = vmatpush1.msra.mxu0 0.0
    %501 = vmatprep.subr.mxu0 0.0
    %502 = vmatpush1.msra.mxu0 0.0
    %503 = vmatprep.subr.mxu0 0.0
    %504 = vmatpush1.msra.mxu0 0.0
    %505 = vmatprep.subr.mxu0 0.0
    %506 = vmatpush1.msra.mxu0 0.0
    %507 = vmatprep.subr.mxu0 0.0
    %508 = vmatpush1.msra.mxu0 0.0
    %509 = vmatprep.subr.mxu0 0.0
    %510 = vmatpush1.msra.mxu0 0.0
    %511 = vmatprep.subr.mxu0 0.0
    %512 = vmatpush1.msra.mxu0 0.0
    %513 = vmatprep.subr.mxu0 0.0
    %514 = vmatpush1.msra.mxu0 0.0
    %515 = vmatprep.subr.mxu0 0.0
    %516 = vmatpush1.msra.mxu0 0.0
    %517 = vmatprep.subr.mxu0 0.0
    %518 = vmatpush1.msra.mxu0 0.0
    %519 = vmatprep.subr.mxu0 0.0
    %520 = vmatpush1.msra.mxu0 0.0
    %521 = vmatprep.subr.mxu0 0.0
    %522 = vmatpush1.msra.mxu0 0.0
    %523 = vmatprep.subr.mxu0 0.0
    %524 = vmatpush1.msra.mxu0 0.0
    %525 = vmatprep.subr.mxu0 0.0
    %526 = vmatpush1.msra.mxu0 0.0
    %527 = vmatprep.subr.mxu0 0.0
    %528 = vmatpush1.msra.mxu0 0.0
    %529 = vmatprep.subr.mxu0 0.0
    %530 = vmatpush1.msra.mxu0 0.0
    %531 = vmatprep.subr.mxu0 0.0
    %532 = vmatpush1.msra.mxu0 0.0
    %533 = vmatprep.subr.mxu0 0.0
    %534 = vmatpush1.msra.mxu0 0.0
    %535 = vmatprep.subr.mxu0 0.0
    %536 = vmatpush1.msra.mxu0 0.0
    %537 = vmatprep.subr.mxu0 0.0
    %538 = vmatpush1.msra.mxu0 0.0
    %539 = vmatprep.subr.mxu0 0.0
    %540 = vmatpush1.msra.mxu0 0.0
    %541 = vmatprep.subr.mxu0 0.0
    %542 = vmatpush1.msra.mxu0 0.0
    %543 = vmatprep.subr.mxu0 0.0
    %544 = vmatpush1.msra.mxu0 0.0
    %545 = vmatprep.subr.mxu0 0.0
    %546 = vmatpush1.msra.mxu0 0.0
    %547 = vmatprep.mubr.f32.mxu0 0.0
    %548 = vmatmul.mubr.f32.gmra.mrb[0].mxu0 %v478
    %v549 = vpop.f32.mrb[0].mxu0
    %v550 = vadd.f32 0.0, %v549
    %v551 = vpop.f32.mrb[0].mxu0
    %552 = vmatprep.mubr.f32.mxu0 0.0
    %553 = vmatmul.mubr.f32.gmra.mrb[0].mxu0 %v481
    %v554 = vpop.f32.mrb[0].mxu0
    %v555 = vadd.f32 0.0, %v554
    %v556 = vpop.f32.mrb[0].mxu0
    %557 = vdwg.mxu0
    %558 = vrot.lane.b32.xlu0 %v150, 112
    %v559 = vpop.permute.xlu0 %558
    %560 = vrot.lane.b32.xlu0 %v155, 112
    %v561 = vpop.permute.xlu0 %560
    %562 = vrot.lane.b32.xlu0 %v150, 80
    %v563 = vpop.permute.xlu0 %562
    %564 = vrot.lane.b32.xlu0 %v155, 80
    %v565 = vpop.permute.xlu0 %564
    %v566 = vsel %vm164, %v559, 0
    %v568 = vsel %vm164, %v561, 0
    %v570 = vsel %vm164, %v563, 0
    %v572 = vsel %vm164, %v565, 0
    %574 = vmatprep.subr.mxu0 0.0
    %575 = vmatpush1.xpose.msra.mxu0 %v570
    %576 = vmatprep.subr.mxu0 0.0
    %577 = vmatpush1.xpose.msra.mxu0 %v572
    %578 = vmatprep.subr.mxu0 0.0
    %579 = vmatpush1.xpose.msra.mxu0 0.0
    %580 = vmatprep.subr.mxu0 0.0
    %581 = vmatpush1.xpose.msra.mxu0 0.0
    %582 = vmatprep.subr.mxu0 0.0
    %583 = vmatpush1.xpose.msra.mxu0 0.0
    %584 = vmatprep.subr.mxu0 0.0
    %585 = vmatpush1.xpose.msra.mxu0 0.0
    %586 = vmatprep.subr.mxu0 0.0
    %587 = vmatpush1.xpose.msra.mxu0 0.0
    %588 = vmatprep.subr.mxu0 0.0
    %589 = vmatpush1.xpose.msra.mxu0 0.0
    %590 = vmatprep.subr.mxu0 0.0
    %591 = vmatpush1.xpose.msra.mxu0 0.0
    %592 = vmatprep.subr.mxu0 0.0
    %593 = vmatpush1.xpose.msra.mxu0 0.0
    %594 = vmatprep.subr.mxu0 0.0
    %595 = vmatpush1.xpose.msra.mxu0 0.0
    %596 = vmatprep.subr.mxu0 0.0
    %597 = vmatpush1.xpose.msra.mxu0 0.0
    %598 = vmatprep.subr.mxu0 0.0
    %599 = vmatpush1.xpose.msra.mxu0 0.0
    %600 = vmatprep.subr.mxu0 0.0
    %601 = vmatpush1.xpose.msra.mxu0 0.0
    %602 = vmatprep.subr.mxu0 0.0
    %603 = vmatpush1.xpose.msra.mxu0 0.0
    %604 = vmatprep.subr.mxu0 0.0
    %605 = vmatpush1.xpose.msra.mxu0 0.0
    %606 = vmatprep.subr.mxu0 0.0
    %607 = vmatpush1.xpose.msra.mxu0 0.0
    %608 = vmatprep.subr.mxu0 0.0
    %609 = vmatpush1.xpose.msra.mxu0 0.0
    %610 = vmatprep.subr.mxu0 0.0
    %611 = vmatpush1.xpose.msra.mxu0 0.0
    %612 = vmatprep.subr.mxu0 0.0
    %613 = vmatpush1.xpose.msra.mxu0 0.0
    %614 = vmatprep.subr.mxu0 0.0
    %615 = vmatpush1.xpose.msra.mxu0 0.0
    %616 = vmatprep.subr.mxu0 0.0
    %617 = vmatpush1.xpose.msra.mxu0 0.0
    %618 = vmatprep.subr.mxu0 0.0
    %619 = vmatpush1.xpose.msra.mxu0 0.0
    %620 = vmatprep.subr.mxu0 0.0
    %621 = vmatpush1.xpose.msra.mxu0 0.0
    %622 = vmatprep.subr.mxu0 0.0
    %623 = vmatpush1.xpose.msra.mxu0 0.0
    %624 = vmatprep.subr.mxu0 0.0
    %625 = vmatpush1.xpose.msra.mxu0 0.0
    %626 = vmatprep.subr.mxu0 0.0
    %627 = vmatpush1.xpose.msra.mxu0 0.0
    %628 = vmatprep.subr.mxu0 0.0
    %629 = vmatpush1.xpose.msra.mxu0 0.0
    %630 = vmatprep.subr.mxu0 0.0
    %631 = vmatpush1.xpose.msra.mxu0 0.0
    %632 = vmatprep.subr.mxu0 0.0
    %633 = vmatpush1.xpose.msra.mxu0 0.0
    %634 = vmatprep.subr.mxu0 0.0
    %635 = vmatpush1.xpose.msra.mxu0 0.0
    %636 = vmatprep.subr.mxu0 0.0
    %637 = vmatpush1.xpose.msra.mxu0 0.0
    %638 = vmatprep.mubr.f32.mxu0 0.0
    %639 = vmatmul.mubr.f32.gmra.mrb[0].mxu0 %v566
    %v640 = vpop.f32.mrb[0].mxu0
    %v641 = vadd.f32 %v61, %v640
    %v642 = vpop.f32.mrb[0].mxu0
    %643 = vmatprep.mubr.f32.mxu0 0.0
    %644 = vmatmul.mubr.f32.gmra.mrb[0].mxu0 %v568
    %v645 = vpop.f32.mrb[0].mxu0
    %v646 = vadd.f32 %v62, %v645
    %v647 = vpop.f32.mrb[0].mxu0
    %648 = vdwg.mxu0
    %v649 = vsel %vm248, %v641, -inf
    %650 = vmax.xlane.f32.xlu0 %v649
    %v651 = vpop.xlane.xlu0 %650
    %v652 = vsel %vm248, %v646, -inf
    %653 = vmax.xlane.f32.xlu0 %v652
    %v654 = vpop.xlane.xlu0 %653
    %v655 = vsub.f32 %v641, %v651
    %v656 = vsub.f32 %v646, %v654
    %v657 = vmul.f32 %v655, 1.442695
    %v658 = vpow.pop %v657
    %v659 = vmul.f32 %v656, 1.442695
    %v660 = vpow.pop %v659
    %v661 = vsel %vm248, %v658, 0.0
    %662 = vadd.xlane.f32.xlu0 %v661
    %v663 = vpop.xlane.xlu0 %662
    %v664 = vsel %vm248, %v660, 0.0
    %665 = vadd.xlane.f32.xlu0 %v664
    %v666 = vpop.xlane.xlu0 %665
    %v667 = vrcp.pop %v663
    %v668 = vmul.f32 %v658, %v667
    %v669 = vrcp.pop %v666
    %v670 = vmul.f32 %v660, %v669
    %671 = vrot.lane.b32.xlu0 %v150, 48
    %v672 = vpop.permute.xlu0 %671
    %673 = vrot.lane.b32.xlu0 %v155, 48
    %v674 = vpop.permute.xlu0 %673
    %v678 = vsel %vm248, %v668, 0
    %v681 = vsel %vm248, %v670, 0
    %683 = vmatprep.subr.mxu0 0.0
    %684 = vmatpush1.msra.mxu0 %v672
    %685 = vmatprep.subr.mxu0 0.0
    %686 = vmatpush1.msra.mxu0 %v674
    %687 = vmatprep.subr.mxu0 0.0
    %688 = vmatpush1.msra.mxu0 0.0
    %689 = vmatprep.subr.mxu0 0.0
    %690 = vmatpush1.msra.mxu0 0.0
    %691 = vmatprep.subr.mxu0 0.0
    %692 = vmatpush1.msra.mxu0 0.0
    %693 = vmatprep.subr.mxu0 0.0
    %694 = vmatpush1.msra.mxu0 0.0
    %695 = vmatprep.subr.mxu0 0.0
    %696 = vmatpush1.msra.mxu0 0.0
    %697 = vmatprep.subr.mxu0 0.0
    %698 = vmatpush1.msra.mxu0 0.0
    %699 = vmatprep.subr.mxu0 0.0
    %700 = vmatpush1.msra.mxu0 0.0
    %701 = vmatprep.subr.mxu0 0.0
    %702 = vmatpush1.msra.mxu0 0.0
    %703 = vmatprep.subr.mxu0 0.0
    %704 = vmatpush1.msra.mxu0 0.0
    %705 = vmatprep.subr.mxu0 0.0
    %706 = vmatpush1.msra.mxu0 0.0
    %707 = vmatprep.subr.mxu0 0.0
    %708 = vmatpush1.msra.mxu0 0.0
    %709 = vmatprep.subr.mxu0 0.0
    %710 = vmatpush1.msra.mxu0 0.0
    %711 = vmatprep.subr.mxu0 0.0
    %712 = vmatpush1.msra.mxu0 0.0
    %713 = vmatprep.subr.mxu0 0.0
    %714 = vmatpush1.msra.mxu0 0.0
    %715 = vmatprep.subr.mxu0 0.0
    %716 = vmatpush1.msra.mxu0 0.0
    %717 = vmatprep.subr.mxu0 0.0
    %718 = vmatpush1.msra.mxu0 0.0
    %719 = vmatprep.subr.mxu0 0.0
    %720 = vmatpush1.msra.mxu0 0.0
    %721 = vmatprep.subr.mxu0 0.0
    %722 = vmatpush1.msra.mxu0 0.0
    %723 = vmatprep.subr.mxu0 0.0
    %724 = vmatpush1.msra.mxu0 0.0
    %725 = vmatprep.subr.mxu0 0.0
    %726 = vmatpush1.msra.mxu0 0.0
    %727 = vmatprep.subr.mxu0 0.0
    %728 = vmatpush1.msra.mxu0 0.0
    %729 = vmatprep.subr.mxu0 0.0
    %730 = vmatpush1.msra.mxu0 0.0
    %731 = vmatprep.subr.mxu0 0.0
    %732 = vmatpush1.msra.mxu0 0.0
    %733 = vmatprep.subr.mxu0 0.0
    %734 = vmatpush1.msra.mxu0 0.0
    %735 = vmatprep.subr.mxu0 0.0
    %736 = vmatpush1.msra.mxu0 0.0
    %737 = vmatprep.subr.mxu0 0.0
    %738 = vmatpush1.msra.mxu0 0.0
    %739 = vmatprep.subr.mxu0 0.0
    %740 = vmatpush1.msra.mxu0 0.0
    %741 = vmatprep.subr.mxu0 0.0
    %742 = vmatpush1.msra.mxu0 0.0
    %743 = vmatprep.subr.mxu0 0.0
    %744 = vmatpush1.msra.mxu0 0.0
    %745 = vmatprep.subr.mxu0 0.0
    %746 = vmatpush1.msra.mxu0 0.0
    %747 = vmatprep.mubr.f32.mxu0 0.0
    %748 = vmatmul.mubr.f32.gmra.mrb[0].mxu0 %v678
    %v749 = vpop.f32.mrb[0].mxu0
    %v750 = vadd.f32 0.0, %v749
    %v751 = vpop.f32.mrb[0].mxu0
    %752 = vmatprep.mubr.f32.mxu0 0.0
    %753 = vmatmul.mubr.f32.gmra.mrb[0].mxu0 %v681
    %v754 = vpop.f32.mrb[0].mxu0
    %v755 = vadd.f32 0.0, %v754
    %v756 = vpop.f32.mrb[0].mxu0
    %757 = vdwg.mxu0
    %758 = vrot.lane.b32.xlu0 %v150, 104
    %v759 = vpop.permute.xlu0 %758
    %760 = vrot.lane.b32.xlu0 %v155, 104
    %v761 = vpop.permute.xlu0 %760
    %762 = vrot.lane.b32.xlu0 %v150, 72
    %v763 = vpop.permute.xlu0 %762
    %764 = vrot.lane.b32.xlu0 %v155, 72
    %v765 = vpop.permute.xlu0 %764
    %v766 = vsel %vm164, %v759, 0
    %v768 = vsel %vm164, %v761, 0
    %v770 = vsel %vm164, %v763, 0
    %v772 = vsel %vm164, %v765, 0
    %774 = vmatprep.subr.mxu0 0.0
    %775 = vmatpush1.xpose.msra.mxu0 %v770
    %776 = vmatprep.subr.mxu0 0.0
    %777 = vmatpush1.xpose.msra.mxu0 %v772
    %778 = vmatprep.subr.mxu0 0.0
    %779 = vmatpush1.xpose.msra.mxu0 0.0
    %780 = vmatprep.subr.mxu0 0.0
    %781 = vmatpush1.xpose.msra.mxu0 0.0
    %782 = vmatprep.subr.mxu0 0.0
    %783 = vmatpush1.xpose.msra.mxu0 0.0
    %784 = vmatprep.subr.mxu0 0.0
    %785 = vmatpush1.xpose.msra.mxu0 0.0
    %786 = vmatprep.subr.mxu0 0.0
    %787 = vmatpush1.xpose.msra.mxu0 0.0
    %788 = vmatprep.subr.mxu0 0.0
    %789 = vmatpush1.xpose.msra.mxu0 0.0
    %790 = vmatprep.subr.mxu0 0.0
    %791 = vmatpush1.xpose.msra.mxu0 0.0
    %792 = vmatprep.subr.mxu0 0.0
    %793 = vmatpush1.xpose.msra.mxu0 0.0
    %794 = vmatprep.subr.mxu0 0.0
    %795 = vmatpush1.xpose.msra.mxu0 0.0
    %796 = vmatprep.subr.mxu0 0.0
    %797 = vmatpush1.xpose.msra.mxu0 0.0
    %798 = vmatprep.subr.mxu0 0.0
    %799 = vmatpush1.xpose.msra.mxu0 0.0
    %800 = vmatprep.subr.mxu0 0.0
    %801 = vmatpush1.xpose.msra.mxu0 0.0
    %802 = vmatprep.subr.mxu0 0.0
    %803 = vmatpush1.xpose.msra.mxu0 0.0
    %804 = vmatprep.subr.mxu0 0.0
    %805 = vmatpush1.xpose.msra.mxu0 0.0
    %806 = vmatprep.subr.mxu0 0.0
    %807 = vmatpush1.xpose.msra.mxu0 0.0
    %808 = vmatprep.subr.mxu0 0.0
    %809 = vmatpush1.xpose.msra.mxu0 0.0
    %810 = vmatprep.subr.mxu0 0.0
    %811 = vmatpush1.xpose.msra.mxu0 0.0
    %812 = vmatprep.subr.mxu0 0.0
    %813 = vmatpush1.xpose.msra.mxu0 0.0
    %814 = vmatprep.subr.mxu0 0.0
    %815 = vmatpush1.xpose.msra.mxu0 0.0
    %816 = vmatprep.subr.mxu0 0.0
    %817 = vmatpush1.xpose.msra.mxu0 0.0
    %818 = vmatprep.subr.mxu0 0.0
    %819 = vmatpush1.xpose.msra.mxu0 0.0
    %820 = vmatprep.subr.mxu0 0.0
    %821 = vmatpush1.xpose.msra.mxu0 0.0
    %822 = vmatprep.subr.mxu0 0.0
    %823 = vmatpush1.xpose.msra.mxu0 0.0
    %824 = vmatprep.subr.mxu0 0.0
    %825 = vmatpush1.xpose.msra.mxu0 0.0
    %826 = vmatprep.subr.mxu0 0.0
    %827 = vmatpush1.xpose.msra.mxu0 0.0
    %828 = vmatprep.subr.mxu0 0.0
    %829 = vmatpush1.xpose.msra.mxu0 0.0
    %830 = vmatprep.subr.mxu0 0.0
    %831 = vmatpush1.xpose.msra.mxu0 0.0
    %832 = vmatprep.subr.mxu0 0.0
    %833 = vmatpush1.xpose.msra.mxu0 0.0
    %834 = vmatprep.subr.mxu0 0.0
    %835 = vmatpush1.xpose.msra.mxu0 0.0
    %836 = vmatprep.subr.mxu0 0.0
    %837 = vmatpush1.xpose.msra.mxu0 0.0
    %838 = vmatprep.mubr.f32.mxu0 0.0
    %839 = vmatmul.mubr.f32.gmra.mrb[0].mxu0 %v766
    %v840 = vpop.f32.mrb[0].mxu0
    %v841 = vadd.f32 %v61, %v840
    %v842 = vpop.f32.mrb[0].mxu0
    %843 = vmatprep.mubr.f32.mxu0 0.0
    %844 = vmatmul.mubr.f32.gmra.mrb[0].mxu0 %v768
    %v845 = vpop.f32.mrb[0].mxu0
    %v846 = vadd.f32 %v62, %v845
    %v847 = vpop.f32.mrb[0].mxu0
    %848 = vdwg.mxu0
    %v849 = vsel %vm248, %v841, -inf
    %850 = vmax.xlane.f32.xlu0 %v849
    %v851 = vpop.xlane.xlu0 %850
    %v852 = vsel %vm248, %v846, -inf
    %853 = vmax.xlane.f32.xlu0 %v852
    %v854 = vpop.xlane.xlu0 %853
    %v855 = vsub.f32 %v841, %v851
    %v856 = vsub.f32 %v846, %v854
    %v857 = vmul.f32 %v855, 1.442695
    %v858 = vpow.pop %v857
    %v859 = vmul.f32 %v856, 1.442695
    %v860 = vpow.pop %v859
    %v861 = vsel %vm248, %v858, 0.0
    %862 = vadd.xlane.f32.xlu0 %v861
    %v863 = vpop.xlane.xlu0 %862
    %v864 = vsel %vm248, %v860, 0.0
    %865 = vadd.xlane.f32.xlu0 %v864
    %v866 = vpop.xlane.xlu0 %865
    %v867 = vrcp.pop %v863
    %v868 = vmul.f32 %v858, %v867
    %v869 = vrcp.pop %v866
    %v870 = vmul.f32 %v860, %v869
    %871 = vrot.lane.b32.xlu0 %v150, 40
    %v872 = vpop.permute.xlu0 %871
    %873 = vrot.lane.b32.xlu0 %v155, 40
    %v874 = vpop.permute.xlu0 %873
    %v878 = vsel %vm248, %v868, 0
    %v881 = vsel %vm248, %v870, 0
    %883 = vmatprep.subr.mxu0 0.0
    %884 = vmatpush1.msra.mxu0 %v872
    %885 = vmatprep.subr.mxu0 0.0
    %886 = vmatpush1.msra.mxu0 %v874
    %887 = vmatprep.subr.mxu0 0.0
    %888 = vmatpush1.msra.mxu0 0.0
    %889 = vmatprep.subr.mxu0 0.0
    %890 = vmatpush1.msra.mxu0 0.0
    %891 = vmatprep.subr.mxu0 0.0
    %892 = vmatpush1.msra.mxu0 0.0
    %893 = vmatprep.subr.mxu0 0.0
    %894 = vmatpush1.msra.mxu0 0.0
    %895 = vmatprep.subr.mxu0 0.0
    %896 = vmatpush1.msra.mxu0 0.0
    %897 = vmatprep.subr.mxu0 0.0
    %898 = vmatpush1.msra.mxu0 0.0
    %899 = vmatprep.subr.mxu0 0.0
    %900 = vmatpush1.msra.mxu0 0.0
    %901 = vmatprep.subr.mxu0 0.0
    %902 = vmatpush1.msra.mxu0 0.0
    %903 = vmatprep.subr.mxu0 0.0
    %904 = vmatpush1.msra.mxu0 0.0
    %905 = vmatprep.subr.mxu0 0.0
    %906 = vmatpush1.msra.mxu0 0.0
    %907 = vmatprep.subr.mxu0 0.0
    %908 = vmatpush1.msra.mxu0 0.0
    %909 = vmatprep.subr.mxu0 0.0
    %910 = vmatpush1.msra.mxu0 0.0
    %911 = vmatprep.subr.mxu0 0.0
    %912 = vmatpush1.msra.mxu0 0.0
    %913 = vmatprep.subr.mxu0 0.0
    %914 = vmatpush1.msra.mxu0 0.0
    %915 = vmatprep.subr.mxu0 0.0
    %916 = vmatpush1.msra.mxu0 0.0
    %917 = vmatprep.subr.mxu0 0.0
    %918 = vmatpush1.msra.mxu0 0.0
    %919 = vmatprep.subr.mxu0 0.0
    %920 = vmatpush1.msra.mxu0 0.0
    %921 = vmatprep.subr.mxu0 0.0
    %922 = vmatpush1.msra.mxu0 0.0
    %923 = vmatprep.subr.mxu0 0.0
    %924 = vmatpush1.msra.mxu0 0.0
    %925 = vmatprep.subr.mxu0 0.0
    %926 = vmatpush1.msra.mxu0 0.0
    %927 = vmatprep.subr.mxu0 0.0
    %928 = vmatpush1.msra.mxu0 0.0
    %929 = vmatprep.subr.mxu0 0.0
    %930 = vmatpush1.msra.mxu0 0.0
    %931 = vmatprep.subr.mxu0 0.0
    %932 = vmatpush1.msra.mxu0 0.0
    %933 = vmatprep.subr.mxu0 0.0
    %934 = vmatpush1.msra.mxu0 0.0
    %935 = vmatprep.subr.mxu0 0.0
    %936 = vmatpush1.msra.mxu0 0.0
    %937 = vmatprep.subr.mxu0 0.0
    %938 = vmatpush1.msra.mxu0 0.0
    %939 = vmatprep.subr.mxu0 0.0
    %940 = vmatpush1.msra.mxu0 0.0
    %941 = vmatprep.subr.mxu0 0.0
    %942 = vmatpush1.msra.mxu0 0.0
    %943 = vmatprep.subr.mxu0 0.0
    %944 = vmatpush1.msra.mxu0 0.0
    %945 = vmatprep.subr.mxu0 0.0
    %946 = vmatpush1.msra.mxu0 0.0
    %947 = vmatprep.mubr.f32.mxu0 0.0
    %948 = vmatmul.mubr.f32.gmra.mrb[0].mxu0 %v878
    %v949 = vpop.f32.mrb[0].mxu0
    %v950 = vadd.f32 0.0, %v949
    %v951 = vpop.f32.mrb[0].mxu0
    %952 = vmatprep.mubr.f32.mxu0 0.0
    %953 = vmatmul.mubr.f32.gmra.mrb[0].mxu0 %v881
    %v954 = vpop.f32.mrb[0].mxu0
    %v955 = vadd.f32 0.0, %v954
    %v956 = vpop.f32.mrb[0].mxu0
    %957 = vdwg.mxu0
    %960 = vrot.lane.b32.xlu0 %v550, 8
    %v961 = vpop.permute.xlu0 %960
    %962 = vrot.lane.b32.xlu0 %v555, 8
    %v963 = vpop.permute.xlu0 %962
    %968 = vrot.lane.b32.xlu0 %v750, 16
    %v969 = vpop.permute.xlu0 %968
    %970 = vrot.lane.b32.xlu0 %v755, 16
    %v971 = vpop.permute.xlu0 %970
    %976 = vrot.lane.b32.xlu0 %v950, 24
    %v977 = vpop.permute.xlu0 %976
    %978 = vrot.lane.b32.xlu0 %v955, 24
    %v979 = vpop.permute.xlu0 %978
    %v982 = vsel %vm164, %v350, %v961
    %v983 = vsel %vm164, %v355, %v963
    %v984 = vsel %vm248, %v982, %v969
    %v985 = vsel %vm248, %v983, %v971
    %vm986 = vcmask 195584
    %v987 = vsel %vm986, %v984, %v977
    %v988 = vsel %vm986, %v985, %v979
    %v989 = vlaneseq
    %v990 = vshrl.u32 %v989, 7
    %v991 = vsub.s32 2, %v990
    %v992 = vrot.slane %v71, %v991
    %997 = vrot.lane.b32.xlu0 %v63, 32
    %v998 = vpop.permute.xlu0 %997
    %999 = vrot.lane.b32.xlu0 %v65, 32
    %v1000 = vpop.permute.xlu0 %999
    %1001 = vrot.lane.b32.xlu0 %v67, 32
    %v1002 = vpop.permute.xlu0 %1001
    %1003 = vrot.lane.b32.xlu0 %v69, 32
    %v1004 = vpop.permute.xlu0 %1003
    %v1010 = vsel %vm76, %v987, 0
    %v1013 = vsel %vm76, %v988, 0
    %1015 = vmatprep.subr.mxu0 0.0
    %1016 = vmatpush1.msra.mxu0 %v998
    %1017 = vmatprep.subr.mxu0 0.0
    %1018 = vmatpush1.msra.mxu0 %v1000
    %1019 = vmatprep.subr.mxu0 0.0
    %1020 = vmatpush1.msra.mxu0 %v1002
    %1021 = vmatprep.subr.mxu0 0.0
    %1022 = vmatpush1.msra.mxu0 %v1004
    %1023 = vmatprep.subr.mxu0 0.0
    %1024 = vmatpush1.msra.mxu0 0.0
    %1025 = vmatprep.subr.mxu0 0.0
    %1026 = vmatpush1.msra.mxu0 0.0
    %1027 = vmatprep.subr.mxu0 0.0
    %1028 = vmatpush1.msra.mxu0 0.0
    %1029 = vmatprep.subr.mxu0 0.0
    %1030 = vmatpush1.msra.mxu0 0.0
    %1031 = vmatprep.subr.mxu0 0.0
    %1032 = vmatpush1.msra.mxu0 0.0
    %1033 = vmatprep.subr.mxu0 0.0
    %1034 = vmatpush1.msra.mxu0 0.0
    %1035 = vmatprep.subr.mxu0 0.0
    %1036 = vmatpush1.msra.mxu0 0.0
    %1037 = vmatprep.subr.mxu0 0.0
    %1038 = vmatpush1.msra.mxu0 0.0
    %1039 = vmatprep.subr.mxu0 0.0
    %1040 = vmatpush1.msra.mxu0 0.0
    %1041 = vmatprep.subr.mxu0 0.0
    %1042 = vmatpush1.msra.mxu0 0.0
    %1043 = vmatprep.subr.mxu0 0.0
    %1044 = vmatpush1.msra.mxu0 0.0
    %1045 = vmatprep.subr.mxu0 0.0
    %1046 = vmatpush1.msra.mxu0 0.0
    %1047 = vmatprep.subr.mxu0 0.0
    %1048 = vmatpush1.msra.mxu0 0.0
    %1049 = vmatprep.subr.mxu0 0.0
    %1050 = vmatpush1.msra.mxu0 0.0
    %1051 = vmatprep.subr.mxu0 0.0
    %1052 = vmatpush1.msra.mxu0 0.0
    %1053 = vmatprep.subr.mxu0 0.0
    %1054 = vmatpush1.msra.mxu0 0.0
    %1055 = vmatprep.subr.mxu0 0.0
    %1056 = vmatpush1.msra.mxu0 0.0
    %1057 = vmatprep.subr.mxu0 0.0
    %1058 = vmatpush1.msra.mxu0 0.0
    %1059 = vmatprep.subr.mxu0 0.0
    %1060 = vmatpush1.msra.mxu0 0.0
    %1061 = vmatprep.subr.mxu0 0.0
    %1062 = vmatpush1.msra.mxu0 0.0
    %1063 = vmatprep.subr.mxu0 0.0
    %1064 = vmatpush1.msra.mxu0 0.0
    %1065 = vmatprep.subr.mxu0 0.0
    %1066 = vmatpush1.msra.mxu0 0.0
    %1067 = vmatprep.subr.mxu0 0.0
    %1068 = vmatpush1.msra.mxu0 0.0
    %1069 = vmatprep.subr.mxu0 0.0
    %1070 = vmatpush1.msra.mxu0 0.0
    %1071 = vmatprep.subr.mxu0 0.0
    %1072 = vmatpush1.msra.mxu0 0.0
    %1073 = vmatprep.subr.mxu0 0.0
    %1074 = vmatpush1.msra.mxu0 0.0
    %1075 = vmatprep.subr.mxu0 0.0
    %1076 = vmatpush1.msra.mxu0 0.0
    %1077 = vmatprep.subr.mxu0 0.0
    %1078 = vmatpush1.msra.mxu0 0.0
    %1079 = vmatprep.mubr.f32.mxu0 0.0
    %1080 = vmatmul.mubr.f32.gmra.mrb[0].mxu0 %v1010
    %v1081 = vpop.f32.mrb[0].mxu0
    %v1082 = vadd.f32 %v992, %v1081
    %v1083 = vpop.f32.mrb[0].mxu0
    %1084 = vmatprep.mubr.f32.mxu0 0.0
    %1085 = vmatmul.mubr.f32.gmra.mrb[0].mxu0 %v1013
    %v1086 = vpop.f32.mrb[0].mxu0
    %v1087 = vadd.f32 %v992, %v1086
    %v1088 = vpop.f32.mrb[0].mxu0
    %1089 = vdwg.mxu0
    %v1090 = vadd.f32 %v1082, %v59
    %v1091 = vadd.f32 %v1087, %v60
    %v1092 = vsel %vm76, %v1090, 0.0
    %1093 = vadd.xlane.f32.xlu0 %v1092
    %v1094 = vpop.xlane.xlu0 %1093
    %v1095 = vsel %vm76, %v1091, 0.0
    %1096 = vadd.xlane.f32.xlu0 %v1095
    %v1097 = vpop.xlane.xlu0 %1096
    %v1098 = vrcp.pop 32.0
    %v1099 = vmul.f32 %v1094, %v1098
    %v1100 = vmul.f32 %v1097, %v1098
    %v1101 = vsub.f32 %v1090, %v1099
    %v1102 = vsub.f32 %v1091, %v1100
    %v1103 = vmul.f32 %v1101, %v1101
    %v1104 = vmul.f32 %v1102, %v1102
    %v1105 = vsel %vm76, %v1103, 0.0
    %1106 = vadd.xlane.f32.xlu0 %v1105
    %v1107 = vpop.xlane.xlu0 %1106
    %v1108 = vsel %vm76, %v1104, 0.0
    %1109 = vadd.xlane.f32.xlu0 %v1108
    %v1110 = vpop.xlane.xlu0 %1109
    %v1111 = vmul.f32 %v1107, %v1098
    %v1112 = vmul.f32 %v1110, %v1098
    %v1113 = vlaneseq
    %v1114 = vshrl.u32 %v1113, 7
    %v1115 = vsub.s32 3, %v1114
    %v1116 = vrot.slane %v71, %v1115
    %v1117 = vmul.f32 %v1116, %v1101
    %v1118 = vmul.f32 %v1116, %v1102
    %v1119 = vadd.f32 %v1111, 1e-06
    %v1120 = vadd.f32 %v1112, 1e-06
    %v1121 = vrsqrt.pop %v1119
    %v1122 = vrsqrt.pop %v1120
    %v1123 = vmul.f32 %v1117, %v1121
    %v1124 = vmul.f32 %v1118, %v1122
    %v1125 = vlaneseq
    %v1126 = vshrl.u32 %v1125, 7
    %v1127 = vsub.s32 4, %v1126
    %v1128 = vrot.slane %v71, %v1127
    %v1129 = vadd.f32 %v1123, %v1128
    %v1130 = vadd.f32 %v1124, %v1128
    %v1131 = vlaneseq
    %v1132 = vshrl.u32 %v1131, 7
    %v1133 = vsub.s32 1, %v1132
    %v1134 = vrot.slane %v71, %v1133
    %v1136 = vsel %vm76, %v1129, 0
    %v1139 = vsel %vm76, %v1130, 0
    %1141 = vmatprep.subr.mxu0 0.0
    %1142 = vmatpush1.msra.mxu0 %v64
    %1143 = vmatprep.subr.mxu0 0.0
    %1144 = vmatpush1.msra.mxu0 %v66
    %1145 = vmatprep.subr.mxu0 0.0
    %1146 = vmatpush1.msra.mxu0 %v68
    %1147 = vmatprep.subr.mxu0 0.0
    %1148 = vmatpush1.msra.mxu0 %v70
    %1149 = vmatprep.subr.mxu0 0.0
    %1150 = vmatpush1.msra.mxu0 0.0
    %1151 = vmatprep.subr.mxu0 0.0
    %1152 = vmatpush1.msra.mxu0 0.0
    %1153 = vmatprep.subr.mxu0 0.0
    %1154 = vmatpush1.msra.mxu0 0.0
    %1155 = vmatprep.subr.mxu0 0.0
    %1156 = vmatpush1.msra.mxu0 0.0
    %1157 = vmatprep.subr.mxu0 0.0
    %1158 = vmatpush1.msra.mxu0 0.0
    %1159 = vmatprep.subr.mxu0 0.0
    %1160 = vmatpush1.msra.mxu0 0.0
    %1161 = vmatprep.subr.mxu0 0.0
    %1162 = vmatpush1.msra.mxu0 0.0
    %1163 = vmatprep.subr.mxu0 0.0
    %1164 = vmatpush1.msra.mxu0 0.0
    %1165 = vmatprep.subr.mxu0 0.0
    %1166 = vmatpush1.msra.mxu0 0.0
    %1167 = vmatprep.subr.mxu0 0.0
    %1168 = vmatpush1.msra.mxu0 0.0
    %1169 = vmatprep.subr.mxu0 0.0
    %1170 = vmatpush1.msra.mxu0 0.0
    %1171 = vmatprep.subr.mxu0 0.0
    %1172 = vmatpush1.msra.mxu0 0.0
    %1173 = vmatprep.subr.mxu0 0.0
    %1174 = vmatpush1.msra.mxu0 0.0
    %1175 = vmatprep.subr.mxu0 0.0
    %1176 = vmatpush1.msra.mxu0 0.0
    %1177 = vmatprep.subr.mxu0 0.0
    %1178 = vmatpush1.msra.mxu0 0.0
    %1179 = vmatprep.subr.mxu0 0.0
    %1180 = vmatpush1.msra.mxu0 0.0
    %1181 = vmatprep.subr.mxu0 0.0
    %1182 = vmatpush1.msra.mxu0 0.0
    %1183 = vmatprep.subr.mxu0 0.0
    %1184 = vmatpush1.msra.mxu0 0.0
    %1185 = vmatprep.subr.mxu0 0.0
    %1186 = vmatpush1.msra.mxu0 0.0
    %1187 = vmatprep.subr.mxu0 0.0
    %1188 = vmatpush1.msra.mxu0 0.0
    %1189 = vmatprep.subr.mxu0 0.0
    %1190 = vmatpush1.msra.mxu0 0.0
    %1191 = vmatprep.subr.mxu0 0.0
    %1192 = vmatpush1.msra.mxu0 0.0
    %1193 = vmatprep.subr.mxu0 0.0
    %1194 = vmatpush1.msra.mxu0 0.0
    %1195 = vmatprep.subr.mxu0 0.0
    %1196 = vmatpush1.msra.mxu0 0.0
    %1197 = vmatprep.subr.mxu0 0.0
    %1198 = vmatpush1.msra.mxu0 0.0
    %1199 = vmatprep.subr.mxu0 0.0
    %1200 = vmatpush1.msra.mxu0 0.0
    %1201 = vmatprep.subr.mxu0 0.0
    %1202 = vmatpush1.msra.mxu0 0.0
    %1203 = vmatprep.subr.mxu0 0.0
    %1204 = vmatpush1.msra.mxu0 0.0
    %1205 = vmatprep.mubr.f32.mxu0 0.0
    %1206 = vmatmul.mubr.f32.gmra.mrb[0].mxu0 %v1136
    %v1207 = vpop.f32.mrb[0].mxu0
    %v1208 = vadd.f32 %v1134, %v1207
    %v1209 = vpop.f32.mrb[0].mxu0
    %1210 = vmatprep.mubr.f32.mxu0 0.0
    %1211 = vmatmul.mubr.f32.gmra.mrb[0].mxu0 %v1139
    %v1212 = vpop.f32.mrb[0].mxu0
    %v1213 = vadd.f32 %v1134, %v1212
    %v1214 = vpop.f32.mrb[0].mxu0
    %1215 = vdwg.mxu0
    %v1216 = vmul.f32 %v1208, 0.5
    %v1217 = vmul.f32 %v1213, 0.5
    %v1218 = vmul.f32 %v1208, 0.70710677
    %v1219 = vmul.f32 %v1213, 0.70710677
    %v1220 = verf.f32.pop %v1218
    %v1221 = verf.f32.pop %v1219
    %v1222 = vadd.f32 %v1220, 1.0
    %v1223 = vadd.f32 %v1221, 1.0
    %v1224 = vmul.f32 %v1216, %v1222
    %v1225 = vmul.f32 %v1217, %v1223
    %v1226 = vlaneseq
    %v1227 = vshrl.u32 %v1226, 7
    %v1228 = vsub.s32 5, %v1227
    %v1229 = vrot.slane %v71, %v1228
    %1234 = vrot.lane.b32.xlu0 %v64, 64
    %v1235 = vpop.permute.xlu0 %1234
    %1236 = vrot.lane.b32.xlu0 %v66, 64
    %v1237 = vpop.permute.xlu0 %1236
    %1238 = vrot.lane.b32.xlu0 %v68, 64
    %v1239 = vpop.permute.xlu0 %1238
    %1240 = vrot.lane.b32.xlu0 %v70, 64
    %v1241 = vpop.permute.xlu0 %1240
    %vm1242 = vcmask 523264
    %v1244 = vsel %vm1242, %v1224, 0
    %v1247 = vsel %vm1242, %v1225, 0
    %v1249 = vsel %vm1242, %v1235, 0
    %v1251 = vsel %vm1242, %v1237, 0
    %v1253 = vsel %vm1242, %v1239, 0
    %v1255 = vsel %vm1242, %v1241, 0
    %1257 = vmatprep.subr.mxu0 0.0
    %1258 = vmatpush1.xpose.msra.mxu0 %v1249
    %1259 = vmatprep.subr.mxu0 0.0
    %1260 = vmatpush1.xpose.msra.mxu0 %v1251
    %1261 = vmatprep.subr.mxu0 0.0
    %1262 = vmatpush1.xpose.msra.mxu0 %v1253
    %1263 = vmatprep.subr.mxu0 0.0
    %1264 = vmatpush1.xpose.msra.mxu0 %v1255
    %1265 = vmatprep.subr.mxu0 0.0
    %1266 = vmatpush1.xpose.msra.mxu0 0.0
    %1267 = vmatprep.subr.mxu0 0.0
    %1268 = vmatpush1.xpose.msra.mxu0 0.0
    %1269 = vmatprep.subr.mxu0 0.0
    %1270 = vmatpush1.xpose.msra.mxu0 0.0
    %1271 = vmatprep.subr.mxu0 0.0
    %1272 = vmatpush1.xpose.msra.mxu0 0.0
    %1273 = vmatprep.subr.mxu0 0.0
    %1274 = vmatpush1.xpose.msra.mxu0 0.0
    %1275 = vmatprep.subr.mxu0 0.0
    %1276 = vmatpush1.xpose.msra.mxu0 0.0
    %1277 = vmatprep.subr.mxu0 0.0
    %1278 = vmatpush1.xpose.msra.mxu0 0.0
    %1279 = vmatprep.subr.mxu0 0.0
    %1280 = vmatpush1.xpose.msra.mxu0 0.0
    %1281 = vmatprep.subr.mxu0 0.0
    %1282 = vmatpush1.xpose.msra.mxu0 0.0
    %1283 = vmatprep.subr.mxu0 0.0
    %1284 = vmatpush1.xpose.msra.mxu0 0.0
    %1285 = vmatprep.subr.mxu0 0.0
    %1286 = vmatpush1.xpose.msra.mxu0 0.0
    %1287 = vmatprep.subr.mxu0 0.0
    %1288 = vmatpush1.xpose.msra.mxu0 0.0
    %1289 = vmatprep.subr.mxu0 0.0
    %1290 = vmatpush1.xpose.msra.mxu0 0.0
    %1291 = vmatprep.subr.mxu0 0.0
    %1292 = vmatpush1.xpose.msra.mxu0 0.0
    %1293 = vmatprep.subr.mxu0 0.0
    %1294 = vmatpush1.xpose.msra.mxu0 0.0
    %1295 = vmatprep.subr.mxu0 0.0
    %1296 = vmatpush1.xpose.msra.mxu0 0.0
    %1297 = vmatprep.subr.mxu0 0.0
    %1298 = vmatpush1.xpose.msra.mxu0 0.0
    %1299 = vmatprep.subr.mxu0 0.0
    %1300 = vmatpush1.xpose.msra.mxu0 0.0
    %1301 = vmatprep.subr.mxu0 0.0
    %1302 = vmatpush1.xpose.msra.mxu0 0.0
    %1303 = vmatprep.subr.mxu0 0.0
    %1304 = vmatpush1.xpose.msra.mxu0 0.0
    %1305 = vmatprep.subr.mxu0 0.0
    %1306 = vmatpush1.xpose.msra.mxu0 0.0
    %1307 = vmatprep.subr.mxu0 0.0
    %1308 = vmatpush1.xpose.msra.mxu0 0.0
    %1309 = vmatprep.subr.mxu0 0.0
    %1310 = vmatpush1.xpose.msra.mxu0 0.0
    %1311 = vmatprep.subr.mxu0 0.0
    %1312 = vmatpush1.xpose.msra.mxu0 0.0
    %1313 = vmatprep.subr.mxu0 0.0
    %1314 = vmatpush1.xpose.msra.mxu0 0.0
    %1315 = vmatprep.subr.mxu0 0.0
    %1316 = vmatpush1.xpose.msra.mxu0 0.0
    %1317 = vmatprep.subr.mxu0 0.0
    %1318 = vmatpush1.xpose.msra.mxu0 0.0
    %1319 = vmatprep.subr.mxu0 0.0
    %1320 = vmatpush1.xpose.msra.mxu0 0.0
    %1321 = vmatprep.mubr.f32.mxu0 0.0
    %1322 = vmatmul.mubr.f32.gmra.mrb[0].mxu0 %v1244
    %v1323 = vpop.f32.mrb[0].mxu0
    %v1324 = vadd.f32 %v1229, %v1323
    %v1325 = vpop.f32.mrb[0].mxu0
    %1326 = vmatprep.mubr.f32.mxu0 0.0
    %1327 = vmatmul.mubr.f32.gmra.mrb[0].mxu0 %v1247
    %v1328 = vpop.f32.mrb[0].mxu0
    %v1329 = vadd.f32 %v1229, %v1328
    %v1330 = vpop.f32.mrb[0].mxu0
    %1331 = vdwg.mxu0
    %v1332 = vadd.f32 %v1324, %v1129
    %v1333 = vadd.f32 %v1329, %v1130
    %v1334 = vsel %vm76, %v1332, 0.0
    %1335 = vadd.xlane.f32.xlu0 %v1334
    %v1336 = vpop.xlane.xlu0 %1335
    %v1337 = vsel %vm76, %v1333, 0.0
    %1338 = vadd.xlane.f32.xlu0 %v1337
    %v1339 = vpop.xlane.xlu0 %1338
    %v1340 = vmul.f32 %v1336, %v1098
    %v1341 = vmul.f32 %v1339, %v1098
    %v1342 = vsub.f32 %v1332, %v1340
    %v1343 = vsub.f32 %v1333, %v1341
    %v1344 = vmul.f32 %v1342, %v1342
    %v1345 = vmul.f32 %v1343, %v1343
    %v1346 = vsel %vm76, %v1344, 0.0
    %1347 = vadd.xlane.f32.xlu0 %v1346
    %v1348 = vpop.xlane.xlu0 %1347
    %v1349 = vsel %vm76, %v1345, 0.0
    %1350 = vadd.xlane.f32.xlu0 %v1349
    %v1351 = vpop.xlane.xlu0 %1350
    %v1352 = vmul.f32 %v1348, %v1098
    %v1353 = vmul.f32 %v1351, %v1098
    %v1354 = vlaneseq
    %v1355 = vshrl.u32 %v1354, 7
    %v1356 = vsub.s32 6, %v1355
    %v1357 = vrot.slane %v71, %v1356
    %v1358 = vmul.f32 %v1357, %v1342
    %v1359 = vmul.f32 %v1357, %v1343
    %v1360 = vadd.f32 %v1352, 1e-06
    %v1361 = vadd.f32 %v1353, 1e-06
    %v1362 = vrsqrt.pop %v1360
    %v1363 = vrsqrt.pop %v1361
    %v1364 = vmul.f32 %v1358, %v1362
    %v1365 = vmul.f32 %v1359, %v1363
    %v1366 = vlaneseq
    %v1367 = vshrl.u32 %v1366, 7
    %v1368 = vsub.s32 7, %v1367
    %v1369 = vrot.slane %v71, %v1368
    %v1370 = vadd.f32 %v1364, %v1369
    %v1371 = vadd.f32 %v1365, %v1369
    %1372 = vst.msk [vmem:[#allocation8] sm:$0xff] %vm76, %v1370
    %1373 = vst.msk [vmem:[#allocation8 + $0x8] sm:$0xff] %vm76, %v1371
    // Predicated region
    $region30: #{tpu_custom_call.1} parent=1 // pred_check
      _
    $region31: #{tpu_custom_call.1} parent=1 // pred_check_branch
      %1375 = sbr.rel (0) target = $region33
    $region32: #{tpu_custom_call.1} parent=1 // pred_region
      %s1377 = ssub.s32 256, 256
      %1378 = vsyncadd [#allocation4], %s1377
      %s1379 = sshll.u32 [#allocation8], 4
      %s1380 = int_to_ptr.vmem [resolvable:$true] %s1379
      %1385 = dma.vmem_to_hbm [thread:$0]  %s1380, 256, %s4, [#allocation4], 128, 128, 8
    $region33: #{tpu_custom_call.1} parent=1 // pred_fallthru
      _
    // Predicated region
    $region34: #{tpu_custom_call.1} parent=1 // pred_check
      _
    $region35: #{tpu_custom_call.1} parent=1 // pred_check_branch
      %1387 = sbr.rel (0) target = $region37
    $region36: #{tpu_custom_call.1} parent=1 // pred_region
      %1388 = dma.done [#allocation4], 256
    $region37: #{tpu_custom_call.1} parent=1 // pred_fallthru
      _
    %1389 = vsyncpa [#allocation3], 1
    %1390 = vsyncpa [#allocation6], 1
    %1391 = vsyncpa [#allocation4], 1

</llo_original>
